<compile_context>
chip_gen: v5e
topology: v5e:2x2
jax: 0.10.0
libtpu: 0.0.40
codegen_flags: <defaults>
</compile_context>

<pallas_src>
import jax
import jax.numpy as jnp
from jax.experimental import pallas as pl
from jax.experimental.pallas import tpu as pltpu


def _round_up(x, k):
    return ((x + k - 1) // k) * k


def _lstsq_stats_kernel(a_ref, b_ref, h_ref, ca_ref, cb_ref):
    # a_ref / b_ref: (3, C_BLK, N) f32 — coordinate-major, lane axis = N.
    inv_n = 1.0 / a_ref.shape[-1]

    a = [a_ref[i] for i in range(3)]          # 3 x (C_BLK, N), dense vregs
    b = [b_ref[i] for i in range(3)]

    # Per-cloud centroids: lane reductions over N (XLU), keepdims for broadcast.
    ca = [jnp.sum(x, axis=-1, keepdims=True) * inv_n for x in a]   # 3 x (C_BLK, 1)
    cb = [jnp.sum(x, axis=-1, keepdims=True) * inv_n for x in b]

    # Explicit centering (kept instead of sufficient-statistics form for
    # numerical robustness with off-origin clouds).
    aa = [a[i] - ca[i] for i in range(3)]     # 3 x (C_BLK, N)
    bb = [b[i] - cb[i] for i in range(3)]

    # H[i, j] = sum_N aa_i * bb_j — 9 VPU multiplies + lane reductions,
    # vectorized over the C_BLK cloud batch.  No MXU involved.
    h_rows = [jnp.sum(aa[i] * bb[j], axis=-1)            # (C_BLK,)
              for i in range(3) for j in range(3)]

    # Lane-dense output slabs: lane axis = C_BLK (multiple of 128).
    h_ref[...] = jnp.stack(h_rows, axis=0)                # (9, C_BLK)
    ca_ref[...] = jnp.stack([x[:, 0] for x in ca], axis=0)  # (3, C_BLK)
    cb_ref[...] = jnp.stack([x[:, 0] for x in cb], axis=0)  # (3, C_BLK)


def _lstsq_stats(inputs, target):
    """Pallas call: returns H (c,3,3), centroid_A (c,3), centroid_B (c,3)."""
    inputs = inputs.astype(jnp.float32)
    target = target.astype(jnp.float32)
    c, n, m = inputs.shape
    assert m == 3

    # Coordinate-major, lane-dense over N.
    a_t = jnp.transpose(inputs, (2, 0, 1))   # (3, c, N)
    b_t = jnp.transpose(target, (2, 0, 1))

    # Pick C_BLK: as many clouds per grid step as the VMEM budget allows
    # (2 inputs x 2 pipeline buffers x 3 coords x N lanes x 4B), capped at 512
    # and at least 128 so the lane-dense output blocks stay 128-aligned.
    # Sized conservatively so the same block fits v7x's 64 MiB VMEM as well as
    # v5e/v6e's 128 MiB.
    n_pad = _round_up(n, 128)
    vmem_budget = 24 * 1024 * 1024
    per_cloud_bytes = 2 * 2 * 3 * n_pad * 4
    max_by_vmem = max(128, (vmem_budget // per_cloud_bytes) // 128 * 128)
    c_blk = int(min(512, max_by_vmem, _round_up(c, 128)))
    # TODO(synk): for very large N (block won't fit VMEM even at c_blk=128) an
    # additional reduction grid axis over N with accumulators would be needed.
    c_pad = _round_up(c, c_blk)
    if c_pad != c:
        a_t = jnp.pad(a_t, ((0, 0), (0, c_pad - c), (0, 0)))
        b_t = jnp.pad(b_t, ((0, 0), (0, c_pad - c), (0, 0)))

    grid = (c_pad // c_blk,)

    h, ca, cb = pl.pallas_call(
        _lstsq_stats_kernel,
        out_shape=(
            jax.ShapeDtypeStruct((9, c_pad), jnp.float32),
            jax.ShapeDtypeStruct((3, c_pad), jnp.float32),
            jax.ShapeDtypeStruct((3, c_pad), jnp.float32),
        ),
        grid_spec=pltpu.PrefetchScalarGridSpec(
            num_scalar_prefetch=0,
            grid=grid,
            in_specs=[
                pl.BlockSpec((3, c_blk, n), lambda i: (0, i, 0)),
                pl.BlockSpec((3, c_blk, n), lambda i: (0, i, 0)),
            ],
            out_specs=[
                pl.BlockSpec((9, c_blk), lambda i: (0, i)),
                pl.BlockSpec((3, c_blk), lambda i: (0, i)),
                pl.BlockSpec((3, c_blk), lambda i: (0, i)),
            ],
        ),
        compiler_params=pltpu.CompilerParams(
            dimension_semantics=("parallel",),
            vmem_limit_bytes=48 * 1024 * 1024,
        ),
        cost_estimate=pl.CostEstimate(
            flops=int(c_pad * n * (2 * 9 + 6)),
            transcendentals=0,
            bytes_accessed=int(2 * 3 * c_pad * n * 4 + 15 * c_pad * 4),
        ),
    )(a_t, b_t)

    H = jnp.transpose(h[:, :c], (1, 0)).reshape(c, 3, 3)
    centroid_A = jnp.transpose(ca[:, :c], (1, 0))   # (c, 3)
    centroid_B = jnp.transpose(cb[:, :c], (1, 0))   # (c, 3)
    return H, centroid_A, centroid_B


def least_squares_layer(inputs, target):
    """Forward of LeastSquaresLayer: returns (R, t).

    inputs, target: (c, N, 3) arrays of corresponding points.
    R: (c, 3, 3) rotation matrices, t: (c, 3) translations.
    """
    inputs = inputs.astype(jnp.float32)
    target = target.astype(jnp.float32)
    assert inputs.shape == target.shape
    c, n, m = inputs.shape

    # Hot path in Pallas: batched centroids + centered cross-covariance H.
    H, centroid_A, centroid_B = _lstsq_stats(inputs, target)

    # TODO(synk): batched 3x3 SVD / determinant have no Pallas equivalent —
    # done in plain JAX on the tiny (c,3,3) matrices.
    U, S, Vt = jnp.linalg.svd(H)
    V = jnp.swapaxes(Vt, -1, -2)
    Ut = jnp.swapaxes(U, -1, -2)

    R0 = jnp.matmul(V, Ut)                           # (c, 3, 3)
    det = jnp.linalg.det(R0)
    flip = jnp.where(det < 0.0, -1.0, 1.0)           # (c,)
    # Reflection fix: flipping the last row of Vt (= last column of V) and
    # recomputing Vt^T @ U^T is a rank-1 correction of R0 — one matmul total.
    R = R0 + (flip - 1.0)[:, None, None] * (V[:, :, -1:] * Ut[:, -1:, :])

    # t = centroid_B - R @ centroid_A
    t = centroid_B - jnp.squeeze(jnp.matmul(R, centroid_A[..., None]), axis=-1)
    return R, t


if __name__ == "__main__":
    key = jax.random.PRNGKey(0)
    k1, k2 = jax.random.split(key)
    c, n, m = 2, 8, 3
    inputs = jax.random.normal(k1, (c, n, m), dtype=jnp.float32)
    target = jax.random.normal(k2, (c, n, m), dtype=jnp.float32)

    R, t = least_squares_layer(inputs, target)
    jax.block_until_ready((R, t))

    # Sanity: Pallas stats vs plain-JAX reference.
    H, cA, cB = _lstsq_stats(inputs, target)
    cA_ref = jnp.mean(inputs, axis=1)
    cB_ref = jnp.mean(target, axis=1)
    AA = inputs - cA_ref[:, None, :]
    BB = target - cB_ref[:, None, :]
    H_ref = jnp.einsum("cni,cnj->cij", AA, BB)
    assert jnp.allclose(H, H_ref, atol=1e-4), "H mismatch"
    assert jnp.allclose(cA, cA_ref, atol=1e-5), "centroid_A mismatch"
    assert jnp.allclose(cB, cB_ref, atol=1e-5), "centroid_B mismatch"

    # R must be a proper rotation (orthonormal, det = +1).
    eye = jnp.broadcast_to(jnp.eye(3, dtype=jnp.float32), (c, 3, 3))
    assert jnp.allclose(jnp.matmul(R, jnp.swapaxes(R, -1, -2)), eye, atol=1e-4)
    assert jnp.allclose(jnp.linalg.det(R), 1.0, atol=1e-4)

    assert R.shape == (c, m, m) and R.dtype == jnp.float32
    assert t.shape == (c, m) and t.dtype == jnp.float32
    print("KERNEL_OK")
</pallas_src>

<mosaic_0001>
module attributes {stable_mosaic.version = 11 : i64} {
  func.func @_lstsq_stats_kernel(%arg0: i32, %arg1: memref<3x128x8xf32, #tpu.memory_space<vmem>>, %arg2: memref<3x128x8xf32, #tpu.memory_space<vmem>>, %arg3: memref<9x128xf32, #tpu.memory_space<vmem>>, %arg4: memref<3x128xf32, #tpu.memory_space<vmem>>, %arg5: memref<3x128xf32, #tpu.memory_space<vmem>>) attributes {dimension_semantics = [#tpu.dimension_semantics<parallel>], iteration_bounds = array<i64: 1>, scalar_prefetch = 0 : i64, scratch_operands = 0 : i64, tpu.core_type = #tpu.core_type<tc>, window_params = [{transform_indices = @transform_0, window_bounds = array<i64: 3, 128, 8>}, {transform_indices = @transform_1, window_bounds = array<i64: 3, 128, 8>}, {transform_indices = @transform_2, window_bounds = array<i64: 9, 128>}, {transform_indices = @transform_3, window_bounds = array<i64: 3, 128>}, {transform_indices = @transform_4, window_bounds = array<i64: 3, 128>}]} {
    %c0 = arith.constant 0 : index
    %c0_0 = arith.constant 0 : index
    %c0_1 = arith.constant 0 : index
    %0 = vector.load %arg1[%c0, %c0_0, %c0_1] : memref<3x128x8xf32, #tpu.memory_space<vmem>>, vector<1x128x8xf32>
    %1 = vector.shape_cast %0 : vector<1x128x8xf32> to vector<128x8xf32>
    %c1 = arith.constant 1 : index
    %c0_2 = arith.constant 0 : index
    %c0_3 = arith.constant 0 : index
    %2 = vector.load %arg1[%c1, %c0_2, %c0_3] : memref<3x128x8xf32, #tpu.memory_space<vmem>>, vector<1x128x8xf32>
    %3 = vector.shape_cast %2 : vector<1x128x8xf32> to vector<128x8xf32>
    %c2 = arith.constant 2 : index
    %c0_4 = arith.constant 0 : index
    %c0_5 = arith.constant 0 : index
    %4 = vector.load %arg1[%c2, %c0_4, %c0_5] : memref<3x128x8xf32, #tpu.memory_space<vmem>>, vector<1x128x8xf32>
    %5 = vector.shape_cast %4 : vector<1x128x8xf32> to vector<128x8xf32>
    %c0_6 = arith.constant 0 : index
    %c0_7 = arith.constant 0 : index
    %c0_8 = arith.constant 0 : index
    %6 = vector.load %arg2[%c0_6, %c0_7, %c0_8] : memref<3x128x8xf32, #tpu.memory_space<vmem>>, vector<1x128x8xf32>
    %7 = vector.shape_cast %6 : vector<1x128x8xf32> to vector<128x8xf32>
    %c1_9 = arith.constant 1 : index
    %c0_10 = arith.constant 0 : index
    %c0_11 = arith.constant 0 : index
    %8 = vector.load %arg2[%c1_9, %c0_10, %c0_11] : memref<3x128x8xf32, #tpu.memory_space<vmem>>, vector<1x128x8xf32>
    %9 = vector.shape_cast %8 : vector<1x128x8xf32> to vector<128x8xf32>
    %c2_12 = arith.constant 2 : index
    %c0_13 = arith.constant 0 : index
    %c0_14 = arith.constant 0 : index
    %10 = vector.load %arg2[%c2_12, %c0_13, %c0_14] : memref<3x128x8xf32, #tpu.memory_space<vmem>>, vector<1x128x8xf32>
    %11 = vector.shape_cast %10 : vector<1x128x8xf32> to vector<128x8xf32>
    %cst = arith.constant dense<0.000000e+00> : vector<128xf32>
    %12 = vector.multi_reduction <add>, %1, %cst [1] : vector<128x8xf32> to vector<128xf32>
    %13 = vector.shape_cast %12 : vector<128xf32> to vector<128x1xf32>
    %cst_15 = arith.constant 1.250000e-01 : f32
    %14 = vector.broadcast %cst_15 : f32 to vector<128x1xf32>
    %15 = arith.mulf %13, %14 : vector<128x1xf32>
    %cst_16 = arith.constant dense<0.000000e+00> : vector<128xf32>
    %16 = vector.multi_reduction <add>, %3, %cst_16 [1] : vector<128x8xf32> to vector<128xf32>
    %17 = vector.shape_cast %16 : vector<128xf32> to vector<128x1xf32>
    %cst_17 = arith.constant 1.250000e-01 : f32
    %18 = vector.broadcast %cst_17 : f32 to vector<128x1xf32>
    %19 = arith.mulf %17, %18 : vector<128x1xf32>
    %cst_18 = arith.constant dense<0.000000e+00> : vector<128xf32>
    %20 = vector.multi_reduction <add>, %5, %cst_18 [1] : vector<128x8xf32> to vector<128xf32>
    %21 = vector.shape_cast %20 : vector<128xf32> to vector<128x1xf32>
    %cst_19 = arith.constant 1.250000e-01 : f32
    %22 = vector.broadcast %cst_19 : f32 to vector<128x1xf32>
    %23 = arith.mulf %21, %22 : vector<128x1xf32>
    %cst_20 = arith.constant dense<0.000000e+00> : vector<128xf32>
    %24 = vector.multi_reduction <add>, %7, %cst_20 [1] : vector<128x8xf32> to vector<128xf32>
    %25 = vector.shape_cast %24 : vector<128xf32> to vector<128x1xf32>
    %cst_21 = arith.constant 1.250000e-01 : f32
    %26 = vector.broadcast %cst_21 : f32 to vector<128x1xf32>
    %27 = arith.mulf %25, %26 : vector<128x1xf32>
    %cst_22 = arith.constant dense<0.000000e+00> : vector<128xf32>
    %28 = vector.multi_reduction <add>, %9, %cst_22 [1] : vector<128x8xf32> to vector<128xf32>
    %29 = vector.shape_cast %28 : vector<128xf32> to vector<128x1xf32>
    %cst_23 = arith.constant 1.250000e-01 : f32
    %30 = vector.broadcast %cst_23 : f32 to vector<128x1xf32>
    %31 = arith.mulf %29, %30 : vector<128x1xf32>
    %cst_24 = arith.constant dense<0.000000e+00> : vector<128xf32>
    %32 = vector.multi_reduction <add>, %11, %cst_24 [1] : vector<128x8xf32> to vector<128xf32>
    %33 = vector.shape_cast %32 : vector<128xf32> to vector<128x1xf32>
    %cst_25 = arith.constant 1.250000e-01 : f32
    %34 = vector.broadcast %cst_25 : f32 to vector<128x1xf32>
    %35 = arith.mulf %33, %34 : vector<128x1xf32>
    %36 = vector.broadcast %15 : vector<128x1xf32> to vector<128x8xf32>
    %37 = arith.subf %1, %36 : vector<128x8xf32>
    %38 = vector.broadcast %19 : vector<128x1xf32> to vector<128x8xf32>
    %39 = arith.subf %3, %38 : vector<128x8xf32>
    %40 = vector.broadcast %23 : vector<128x1xf32> to vector<128x8xf32>
    %41 = arith.subf %5, %40 : vector<128x8xf32>
    %42 = vector.broadcast %27 : vector<128x1xf32> to vector<128x8xf32>
    %43 = arith.subf %7, %42 : vector<128x8xf32>
    %44 = vector.broadcast %31 : vector<128x1xf32> to vector<128x8xf32>
    %45 = arith.subf %9, %44 : vector<128x8xf32>
    %46 = vector.broadcast %35 : vector<128x1xf32> to vector<128x8xf32>
    %47 = arith.subf %11, %46 : vector<128x8xf32>
    %48 = arith.mulf %37, %43 : vector<128x8xf32>
    %cst_26 = arith.constant dense<0.000000e+00> : vector<128xf32>
    %49 = vector.multi_reduction <add>, %48, %cst_26 [1] : vector<128x8xf32> to vector<128xf32>
    %50 = arith.mulf %37, %45 : vector<128x8xf32>
    %cst_27 = arith.constant dense<0.000000e+00> : vector<128xf32>
    %51 = vector.multi_reduction <add>, %50, %cst_27 [1] : vector<128x8xf32> to vector<128xf32>
    %52 = arith.mulf %37, %47 : vector<128x8xf32>
    %cst_28 = arith.constant dense<0.000000e+00> : vector<128xf32>
    %53 = vector.multi_reduction <add>, %52, %cst_28 [1] : vector<128x8xf32> to vector<128xf32>
    %54 = arith.mulf %39, %43 : vector<128x8xf32>
    %cst_29 = arith.constant dense<0.000000e+00> : vector<128xf32>
    %55 = vector.multi_reduction <add>, %54, %cst_29 [1] : vector<128x8xf32> to vector<128xf32>
    %56 = arith.mulf %39, %45 : vector<128x8xf32>
    %cst_30 = arith.constant dense<0.000000e+00> : vector<128xf32>
    %57 = vector.multi_reduction <add>, %56, %cst_30 [1] : vector<128x8xf32> to vector<128xf32>
    %58 = arith.mulf %39, %47 : vector<128x8xf32>
    %cst_31 = arith.constant dense<0.000000e+00> : vector<128xf32>
    %59 = vector.multi_reduction <add>, %58, %cst_31 [1] : vector<128x8xf32> to vector<128xf32>
    %60 = arith.mulf %41, %43 : vector<128x8xf32>
    %cst_32 = arith.constant dense<0.000000e+00> : vector<128xf32>
    %61 = vector.multi_reduction <add>, %60, %cst_32 [1] : vector<128x8xf32> to vector<128xf32>
    %62 = arith.mulf %41, %45 : vector<128x8xf32>
    %cst_33 = arith.constant dense<0.000000e+00> : vector<128xf32>
    %63 = vector.multi_reduction <add>, %62, %cst_33 [1] : vector<128x8xf32> to vector<128xf32>
    %64 = arith.mulf %41, %47 : vector<128x8xf32>
    %cst_34 = arith.constant dense<0.000000e+00> : vector<128xf32>
    %65 = vector.multi_reduction <add>, %64, %cst_34 [1] : vector<128x8xf32> to vector<128xf32>
    %66 = vector.shape_cast %49 : vector<128xf32> to vector<1x128xf32>
    %67 = vector.shape_cast %51 : vector<128xf32> to vector<1x128xf32>
    %68 = vector.shape_cast %53 : vector<128xf32> to vector<1x128xf32>
    %69 = vector.shape_cast %55 : vector<128xf32> to vector<1x128xf32>
    %70 = vector.shape_cast %57 : vector<128xf32> to vector<1x128xf32>
    %71 = vector.shape_cast %59 : vector<128xf32> to vector<1x128xf32>
    %72 = vector.shape_cast %61 : vector<128xf32> to vector<1x128xf32>
    %73 = vector.shape_cast %63 : vector<128xf32> to vector<1x128xf32>
    %74 = vector.shape_cast %65 : vector<128xf32> to vector<1x128xf32>
    %75 = tpu.concatenate %66, %67, %68, %69, %70, %71, %72, %73, %74 in 0 : vector<1x128xf32>, vector<1x128xf32>, vector<1x128xf32>, vector<1x128xf32>, vector<1x128xf32>, vector<1x128xf32>, vector<1x128xf32>, vector<1x128xf32>, vector<1x128xf32> -> vector<9x128xf32>
    %c0_35 = arith.constant 0 : index
    %c0_36 = arith.constant 0 : index
    %76 = vector.load %arg3[%c0_35, %c0_36] : memref<9x128xf32, #tpu.memory_space<vmem>>, vector<9x128xf32>
    tpu.vector_store %arg3[%c0_35, %c0_36], %75 {strides = array<i32>} : memref<9x128xf32, #tpu.memory_space<vmem>>, vector<9x128xf32>,
    %77 = vector.shape_cast %15 : vector<128x1xf32> to vector<128xf32>
    %78 = vector.shape_cast %19 : vector<128x1xf32> to vector<128xf32>
    %79 = vector.shape_cast %23 : vector<128x1xf32> to vector<128xf32>
    %80 = vector.shape_cast %77 : vector<128xf32> to vector<1x128xf32>
    %81 = vector.shape_cast %78 : vector<128xf32> to vector<1x128xf32>
    %82 = vector.shape_cast %79 : vector<128xf32> to vector<1x128xf32>
    %83 = tpu.concatenate %80, %81, %82 in 0 : vector<1x128xf32>, vector<1x128xf32>, vector<1x128xf32> -> vector<3x128xf32>
    %c0_37 = arith.constant 0 : index
    %c0_38 = arith.constant 0 : index
    %84 = vector.load %arg4[%c0_37, %c0_38] : memref<3x128xf32, #tpu.memory_space<vmem>>, vector<3x128xf32>
    tpu.vector_store %arg4[%c0_37, %c0_38], %83 {strides = array<i32>} : memref<3x128xf32, #tpu.memory_space<vmem>>, vector<3x128xf32>,
    %85 = vector.shape_cast %27 : vector<128x1xf32> to vector<128xf32>
    %86 = vector.shape_cast %31 : vector<128x1xf32> to vector<128xf32>
    %87 = vector.shape_cast %35 : vector<128x1xf32> to vector<128xf32>
    %88 = vector.shape_cast %85 : vector<128xf32> to vector<1x128xf32>
    %89 = vector.shape_cast %86 : vector<128xf32> to vector<1x128xf32>
    %90 = vector.shape_cast %87 : vector<128xf32> to vector<1x128xf32>
    %91 = tpu.concatenate %88, %89, %90 in 0 : vector<1x128xf32>, vector<1x128xf32>, vector<1x128xf32> -> vector<3x128xf32>
    %c0_39 = arith.constant 0 : index
    %c0_40 = arith.constant 0 : index
    %92 = vector.load %arg5[%c0_39, %c0_40] : memref<3x128xf32, #tpu.memory_space<vmem>>, vector<3x128xf32>
    tpu.vector_store %arg5[%c0_39, %c0_40], %91 {strides = array<i32>} : memref<3x128xf32, #tpu.memory_space<vmem>>, vector<3x128xf32>,
    return
  }
  func.func @transform_0(%arg0: i32) -> (i32, i32, i32) {
    %c0_i32 = arith.constant 0 : i32
    %c0_i32_0 = arith.constant 0 : i32
    %c0_i32_1 = arith.constant 0 : i32
    return %c0_i32, %arg0, %c0_i32_0 : i32, i32, i32
  }
  func.func @transform_1(%arg0: i32) -> (i32, i32, i32) {
    %c0_i32 = arith.constant 0 : i32
    %c0_i32_0 = arith.constant 0 : i32
    %c0_i32_1 = arith.constant 0 : i32
    return %c0_i32, %arg0, %c0_i32_0 : i32, i32, i32
  }
  func.func @transform_2(%arg0: i32) -> (i32, i32) {
    %c0_i32 = arith.constant 0 : i32
    %c0_i32_0 = arith.constant 0 : i32
    return %c0_i32, %arg0 : i32, i32
  }
  func.func @transform_3(%arg0: i32) -> (i32, i32) {
    %c0_i32 = arith.constant 0 : i32
    %c0_i32_0 = arith.constant 0 : i32
    return %c0_i32, %arg0 : i32, i32
  }
  func.func @transform_4(%arg0: i32) -> (i32, i32) {
    %c0_i32 = arith.constant 0 : i32
    %c0_i32_0 = arith.constant 0 : i32
    return %c0_i32, %arg0 : i32, i32
  }
}

</mosaic_0001>

<llo_original>
// kernel: tpu_custom_call.1
$region0: #{tpu_custom_call.1}
  #allocation0 [shape = 'u32[]', space=smem, size = 0x4, offset = 0x4, fixed_abs, tag = 'smem constant byte address 0x4 - core index']
  #allocation1 [shape = 'u32[72,128]{1,0:T(1,128)}', space=vmem, size = 0x9000, scoped, tag = 'internal scratch']
  %s0 = inlined_call_operand.vmem [shape: f32[3,128,8], index: 0, kind: input, shape index: {}]
  %s1 = inlined_call_operand.vmem [shape: f32[3,128,8], index: 1, kind: input, shape index: {}]
  %s2 = inlined_call_operand.hbm [shape: f32[9,128], index: 2, kind: output, shape index: {0}]
  %s3 = inlined_call_operand.hbm [shape: f32[3,128], index: 3, kind: output, shape index: {1}]
  %s4 = inlined_call_operand.hbm [shape: f32[3,128], index: 4, kind: output, shape index: {2}]
  %5 = xla_tuple %s2, %s3, %s4
  %s6 = sld [smem:[#allocation0]]
  $region34: #{tpu_custom_call.1} parent=0
    _
  %s8 = ssub.s32 1, %s6
  %s9 = scalar_select 0, %s8, %s6
  $region1: #{tpu_custom_call.1} parent=0
    #allocation2 [shape = 'u8[8192]{0}', space=vmem, size = 0x2000, scoped, tag = 'output window, operand 0, single buffered']
    #allocation3 [shape = 's32[1]{0}', space=sflag, size = 0x4, scoped, tag = 'scoped memory for tpu_custom_call.1']
    #allocation4 [shape = 'u8[2048]{0}', space=vmem, size = 0x800, scoped, tag = 'output window, operand 1, single buffered']
    #allocation5 [shape = 's32[1]{0}', space=sflag, size = 0x4, scoped, tag = 'scoped memory for tpu_custom_call.1']
    #allocation6 [shape = 'u8[2048]{0}', space=vmem, size = 0x800, scoped, tag = 'output window, operand 2, single buffered']
    %10 = vsyncpa [#allocation3], 0
    %11 = vsyncpa [#allocation5], 0
    // Predicated region
    $region2: #{tpu_custom_call.1} parent=1 // pred_check
      _
    $region3: #{tpu_custom_call.1} parent=1 // pred_check_branch
      %13 = sbr.rel (0) target = $region5
    $region4: #{tpu_custom_call.1} parent=1 // pred_region
      _
    $region5: #{tpu_custom_call.1} parent=1 // pred_fallthru
      _
    // Predicated region
    $region6: #{tpu_custom_call.1} parent=1 // pred_check
      _
    $region7: #{tpu_custom_call.1} parent=1 // pred_check_branch
      %15 = sbr.rel (0) target = $region9
    $region8: #{tpu_custom_call.1} parent=1 // pred_region
      _
    $region9: #{tpu_custom_call.1} parent=1 // pred_fallthru
      _
    %v16 = vld [vmem:[%s0] sm:$0xff]
    %v17 = vld [vmem:[%s0 + $0x8] sm:$0xff]
    %v18 = vld [vmem:[%s0 + $0x10] sm:$0xff]
    %v19 = vld [vmem:[%s0 + $0x18] sm:$0xff]
    %v20 = vld [vmem:[%s0 + $0x20] sm:$0xff]
    %v21 = vld [vmem:[%s0 + $0x28] sm:$0xff]
    %v22 = vld [vmem:[%s0 + $0x30] sm:$0xff]
    %v23 = vld [vmem:[%s0 + $0x38] sm:$0xff]
    %v24 = vld [vmem:[%s0 + $0x40] sm:$0xff]
    %v25 = vld [vmem:[%s0 + $0x48] sm:$0xff]
    %v26 = vld [vmem:[%s0 + $0x50] sm:$0xff]
    %v27 = vld [vmem:[%s0 + $0x58] sm:$0xff]
    %v28 = vld [vmem:[%s0 + $0x60] sm:$0xff]
    %v29 = vld [vmem:[%s0 + $0x68] sm:$0xff]
    %v30 = vld [vmem:[%s0 + $0x70] sm:$0xff]
    %v31 = vld [vmem:[%s0 + $0x78] sm:$0xff]
    %s32 = scalar_lea.vmem %s0, 128
    %v33 = vld [vmem:[%s32] sm:$0xff]
    %v34 = vld [vmem:[%s32 + $0x8] sm:$0xff]
    %v35 = vld [vmem:[%s32 + $0x10] sm:$0xff]
    %v36 = vld [vmem:[%s32 + $0x18] sm:$0xff]
    %v37 = vld [vmem:[%s32 + $0x20] sm:$0xff]
    %v38 = vld [vmem:[%s32 + $0x28] sm:$0xff]
    %v39 = vld [vmem:[%s32 + $0x30] sm:$0xff]
    %v40 = vld [vmem:[%s32 + $0x38] sm:$0xff]
    %v41 = vld [vmem:[%s32 + $0x40] sm:$0xff]
    %v42 = vld [vmem:[%s32 + $0x48] sm:$0xff]
    %v43 = vld [vmem:[%s32 + $0x50] sm:$0xff]
    %v44 = vld [vmem:[%s32 + $0x58] sm:$0xff]
    %v45 = vld [vmem:[%s32 + $0x60] sm:$0xff]
    %v46 = vld [vmem:[%s32 + $0x68] sm:$0xff]
    %v47 = vld [vmem:[%s32 + $0x70] sm:$0xff]
    %v48 = vld [vmem:[%s32 + $0x78] sm:$0xff]
    %s49 = scalar_lea.vmem %s0, 256
    %v50 = vld [vmem:[%s49] sm:$0xff]
    %v51 = vld [vmem:[%s49 + $0x8] sm:$0xff]
    %v52 = vld [vmem:[%s49 + $0x10] sm:$0xff]
    %v53 = vld [vmem:[%s49 + $0x18] sm:$0xff]
    %v54 = vld [vmem:[%s49 + $0x20] sm:$0xff]
    %v55 = vld [vmem:[%s49 + $0x28] sm:$0xff]
    %v56 = vld [vmem:[%s49 + $0x30] sm:$0xff]
    %v57 = vld [vmem:[%s49 + $0x38] sm:$0xff]
    %v58 = vld [vmem:[%s49 + $0x40] sm:$0xff]
    %v59 = vld [vmem:[%s49 + $0x48] sm:$0xff]
    %v60 = vld [vmem:[%s49 + $0x50] sm:$0xff]
    %v61 = vld [vmem:[%s49 + $0x58] sm:$0xff]
    %v62 = vld [vmem:[%s49 + $0x60] sm:$0xff]
    %v63 = vld [vmem:[%s49 + $0x68] sm:$0xff]
    %v64 = vld [vmem:[%s49 + $0x70] sm:$0xff]
    %v65 = vld [vmem:[%s49 + $0x78] sm:$0xff]
    %v66 = vld [vmem:[%s1] sm:$0xff]
    %v67 = vld [vmem:[%s1 + $0x8] sm:$0xff]
    %v68 = vld [vmem:[%s1 + $0x10] sm:$0xff]
    %v69 = vld [vmem:[%s1 + $0x18] sm:$0xff]
    %v70 = vld [vmem:[%s1 + $0x20] sm:$0xff]
    %v71 = vld [vmem:[%s1 + $0x28] sm:$0xff]
    %v72 = vld [vmem:[%s1 + $0x30] sm:$0xff]
    %v73 = vld [vmem:[%s1 + $0x38] sm:$0xff]
    %v74 = vld [vmem:[%s1 + $0x40] sm:$0xff]
    %v75 = vld [vmem:[%s1 + $0x48] sm:$0xff]
    %v76 = vld [vmem:[%s1 + $0x50] sm:$0xff]
    %v77 = vld [vmem:[%s1 + $0x58] sm:$0xff]
    %v78 = vld [vmem:[%s1 + $0x60] sm:$0xff]
    %v79 = vld [vmem:[%s1 + $0x68] sm:$0xff]
    %v80 = vld [vmem:[%s1 + $0x70] sm:$0xff]
    %v81 = vld [vmem:[%s1 + $0x78] sm:$0xff]
    %s82 = scalar_lea.vmem %s1, 128
    %v83 = vld [vmem:[%s82] sm:$0xff]
    %v84 = vld [vmem:[%s82 + $0x8] sm:$0xff]
    %v85 = vld [vmem:[%s82 + $0x10] sm:$0xff]
    %v86 = vld [vmem:[%s82 + $0x18] sm:$0xff]
    %v87 = vld [vmem:[%s82 + $0x20] sm:$0xff]
    %v88 = vld [vmem:[%s82 + $0x28] sm:$0xff]
    %v89 = vld [vmem:[%s82 + $0x30] sm:$0xff]
    %v90 = vld [vmem:[%s82 + $0x38] sm:$0xff]
    %v91 = vld [vmem:[%s82 + $0x40] sm:$0xff]
    %v92 = vld [vmem:[%s82 + $0x48] sm:$0xff]
    %v93 = vld [vmem:[%s82 + $0x50] sm:$0xff]
    %v94 = vld [vmem:[%s82 + $0x58] sm:$0xff]
    %v95 = vld [vmem:[%s82 + $0x60] sm:$0xff]
    %v96 = vld [vmem:[%s82 + $0x68] sm:$0xff]
    %v97 = vld [vmem:[%s82 + $0x70] sm:$0xff]
    %v98 = vld [vmem:[%s82 + $0x78] sm:$0xff]
    %s99 = scalar_lea.vmem %s1, 256
    %v100 = vld [vmem:[%s99] sm:$0xff]
    %v101 = vld [vmem:[%s99 + $0x8] sm:$0xff]
    %v102 = vld [vmem:[%s99 + $0x10] sm:$0xff]
    %v103 = vld [vmem:[%s99 + $0x18] sm:$0xff]
    %v104 = vld [vmem:[%s99 + $0x20] sm:$0xff]
    %v105 = vld [vmem:[%s99 + $0x28] sm:$0xff]
    %v106 = vld [vmem:[%s99 + $0x30] sm:$0xff]
    %v107 = vld [vmem:[%s99 + $0x38] sm:$0xff]
    %v108 = vld [vmem:[%s99 + $0x40] sm:$0xff]
    %v109 = vld [vmem:[%s99 + $0x48] sm:$0xff]
    %v110 = vld [vmem:[%s99 + $0x50] sm:$0xff]
    %v111 = vld [vmem:[%s99 + $0x58] sm:$0xff]
    %v112 = vld [vmem:[%s99 + $0x60] sm:$0xff]
    %v113 = vld [vmem:[%s99 + $0x68] sm:$0xff]
    %v114 = vld [vmem:[%s99 + $0x70] sm:$0xff]
    %v115 = vld [vmem:[%s99 + $0x78] sm:$0xff]
    %vm116 = vcmask 64512
    %v117 = vsel %vm116, %v16, 0.0
    %118 = vadd.xlane.f32.xlu0 %v117
    %v119 = vpop.xlane.xlu0 %118
    %v120 = vsel %vm116, %v17, 0.0
    %121 = vadd.xlane.f32.xlu0 %v120
    %v122 = vpop.xlane.xlu0 %121
    %v123 = vsel %vm116, %v18, 0.0
    %124 = vadd.xlane.f32.xlu0 %v123
    %v125 = vpop.xlane.xlu0 %124
    %v126 = vsel %vm116, %v19, 0.0
    %127 = vadd.xlane.f32.xlu0 %v126
    %v128 = vpop.xlane.xlu0 %127
    %v129 = vsel %vm116, %v20, 0.0
    %130 = vadd.xlane.f32.xlu0 %v129
    %v131 = vpop.xlane.xlu0 %130
    %v132 = vsel %vm116, %v21, 0.0
    %133 = vadd.xlane.f32.xlu0 %v132
    %v134 = vpop.xlane.xlu0 %133
    %v135 = vsel %vm116, %v22, 0.0
    %136 = vadd.xlane.f32.xlu0 %v135
    %v137 = vpop.xlane.xlu0 %136
    %v138 = vsel %vm116, %v23, 0.0
    %139 = vadd.xlane.f32.xlu0 %v138
    %v140 = vpop.xlane.xlu0 %139
    %v141 = vsel %vm116, %v24, 0.0
    %142 = vadd.xlane.f32.xlu0 %v141
    %v143 = vpop.xlane.xlu0 %142
    %v144 = vsel %vm116, %v25, 0.0
    %145 = vadd.xlane.f32.xlu0 %v144
    %v146 = vpop.xlane.xlu0 %145
    %v147 = vsel %vm116, %v26, 0.0
    %148 = vadd.xlane.f32.xlu0 %v147
    %v149 = vpop.xlane.xlu0 %148
    %v150 = vsel %vm116, %v27, 0.0
    %151 = vadd.xlane.f32.xlu0 %v150
    %v152 = vpop.xlane.xlu0 %151
    %v153 = vsel %vm116, %v28, 0.0
    %154 = vadd.xlane.f32.xlu0 %v153
    %v155 = vpop.xlane.xlu0 %154
    %v156 = vsel %vm116, %v29, 0.0
    %157 = vadd.xlane.f32.xlu0 %v156
    %v158 = vpop.xlane.xlu0 %157
    %v159 = vsel %vm116, %v30, 0.0
    %160 = vadd.xlane.f32.xlu0 %v159
    %v161 = vpop.xlane.xlu0 %160
    %v162 = vsel %vm116, %v31, 0.0
    %163 = vadd.xlane.f32.xlu0 %v162
    %v164 = vpop.xlane.xlu0 %163
    %v165 = vmul.f32 %v119, 0.125
    %v166 = vmul.f32 %v122, 0.125
    %v167 = vmul.f32 %v125, 0.125
    %v168 = vmul.f32 %v128, 0.125
    %v169 = vmul.f32 %v131, 0.125
    %v170 = vmul.f32 %v134, 0.125
    %v171 = vmul.f32 %v137, 0.125
    %v172 = vmul.f32 %v140, 0.125
    %v173 = vmul.f32 %v143, 0.125
    %v174 = vmul.f32 %v146, 0.125
    %v175 = vmul.f32 %v149, 0.125
    %v176 = vmul.f32 %v152, 0.125
    %v177 = vmul.f32 %v155, 0.125
    %v178 = vmul.f32 %v158, 0.125
    %v179 = vmul.f32 %v161, 0.125
    %v180 = vmul.f32 %v164, 0.125
    %v181 = vsel %vm116, %v33, 0.0
    %182 = vadd.xlane.f32.xlu0 %v181
    %v183 = vpop.xlane.xlu0 %182
    %v184 = vsel %vm116, %v34, 0.0
    %185 = vadd.xlane.f32.xlu0 %v184
    %v186 = vpop.xlane.xlu0 %185
    %v187 = vsel %vm116, %v35, 0.0
    %188 = vadd.xlane.f32.xlu0 %v187
    %v189 = vpop.xlane.xlu0 %188
    %v190 = vsel %vm116, %v36, 0.0
    %191 = vadd.xlane.f32.xlu0 %v190
    %v192 = vpop.xlane.xlu0 %191
    %v193 = vsel %vm116, %v37, 0.0
    %194 = vadd.xlane.f32.xlu0 %v193
    %v195 = vpop.xlane.xlu0 %194
    %v196 = vsel %vm116, %v38, 0.0
    %197 = vadd.xlane.f32.xlu0 %v196
    %v198 = vpop.xlane.xlu0 %197
    %v199 = vsel %vm116, %v39, 0.0
    %200 = vadd.xlane.f32.xlu0 %v199
    %v201 = vpop.xlane.xlu0 %200
    %v202 = vsel %vm116, %v40, 0.0
    %203 = vadd.xlane.f32.xlu0 %v202
    %v204 = vpop.xlane.xlu0 %203
    %v205 = vsel %vm116, %v41, 0.0
    %206 = vadd.xlane.f32.xlu0 %v205
    %v207 = vpop.xlane.xlu0 %206
    %v208 = vsel %vm116, %v42, 0.0
    %209 = vadd.xlane.f32.xlu0 %v208
    %v210 = vpop.xlane.xlu0 %209
    %v211 = vsel %vm116, %v43, 0.0
    %212 = vadd.xlane.f32.xlu0 %v211
    %v213 = vpop.xlane.xlu0 %212
    %v214 = vsel %vm116, %v44, 0.0
    %215 = vadd.xlane.f32.xlu0 %v214
    %v216 = vpop.xlane.xlu0 %215
    %v217 = vsel %vm116, %v45, 0.0
    %218 = vadd.xlane.f32.xlu0 %v217
    %v219 = vpop.xlane.xlu0 %218
    %v220 = vsel %vm116, %v46, 0.0
    %221 = vadd.xlane.f32.xlu0 %v220
    %v222 = vpop.xlane.xlu0 %221
    %v223 = vsel %vm116, %v47, 0.0
    %224 = vadd.xlane.f32.xlu0 %v223
    %v225 = vpop.xlane.xlu0 %224
    %v226 = vsel %vm116, %v48, 0.0
    %227 = vadd.xlane.f32.xlu0 %v226
    %v228 = vpop.xlane.xlu0 %227
    %v229 = vmul.f32 %v183, 0.125
    %v230 = vmul.f32 %v186, 0.125
    %v231 = vmul.f32 %v189, 0.125
    %v232 = vmul.f32 %v192, 0.125
    %v233 = vmul.f32 %v195, 0.125
    %v234 = vmul.f32 %v198, 0.125
    %v235 = vmul.f32 %v201, 0.125
    %v236 = vmul.f32 %v204, 0.125
    %v237 = vmul.f32 %v207, 0.125
    %v238 = vmul.f32 %v210, 0.125
    %v239 = vmul.f32 %v213, 0.125
    %v240 = vmul.f32 %v216, 0.125
    %v241 = vmul.f32 %v219, 0.125
    %v242 = vmul.f32 %v222, 0.125
    %v243 = vmul.f32 %v225, 0.125
    %v244 = vmul.f32 %v228, 0.125
    %v245 = vsel %vm116, %v50, 0.0
    %246 = vadd.xlane.f32.xlu0 %v245
    %v247 = vpop.xlane.xlu0 %246
    %v248 = vsel %vm116, %v51, 0.0
    %249 = vadd.xlane.f32.xlu0 %v248
    %v250 = vpop.xlane.xlu0 %249
    %v251 = vsel %vm116, %v52, 0.0
    %252 = vadd.xlane.f32.xlu0 %v251
    %v253 = vpop.xlane.xlu0 %252
    %v254 = vsel %vm116, %v53, 0.0
    %255 = vadd.xlane.f32.xlu0 %v254
    %v256 = vpop.xlane.xlu0 %255
    %v257 = vsel %vm116, %v54, 0.0
    %258 = vadd.xlane.f32.xlu0 %v257
    %v259 = vpop.xlane.xlu0 %258
    %v260 = vsel %vm116, %v55, 0.0
    %261 = vadd.xlane.f32.xlu0 %v260
    %v262 = vpop.xlane.xlu0 %261
    %v263 = vsel %vm116, %v56, 0.0
    %264 = vadd.xlane.f32.xlu0 %v263
    %v265 = vpop.xlane.xlu0 %264
    %v266 = vsel %vm116, %v57, 0.0
    %267 = vadd.xlane.f32.xlu0 %v266
    %v268 = vpop.xlane.xlu0 %267
    %v269 = vsel %vm116, %v58, 0.0
    %270 = vadd.xlane.f32.xlu0 %v269
    %v271 = vpop.xlane.xlu0 %270
    %v272 = vsel %vm116, %v59, 0.0
    %273 = vadd.xlane.f32.xlu0 %v272
    %v274 = vpop.xlane.xlu0 %273
    %v275 = vsel %vm116, %v60, 0.0
    %276 = vadd.xlane.f32.xlu0 %v275
    %v277 = vpop.xlane.xlu0 %276
    %v278 = vsel %vm116, %v61, 0.0
    %279 = vadd.xlane.f32.xlu0 %v278
    %v280 = vpop.xlane.xlu0 %279
    %v281 = vsel %vm116, %v62, 0.0
    %282 = vadd.xlane.f32.xlu0 %v281
    %v283 = vpop.xlane.xlu0 %282
    %v284 = vsel %vm116, %v63, 0.0
    %285 = vadd.xlane.f32.xlu0 %v284
    %v286 = vpop.xlane.xlu0 %285
    %v287 = vsel %vm116, %v64, 0.0
    %288 = vadd.xlane.f32.xlu0 %v287
    %v289 = vpop.xlane.xlu0 %288
    %v290 = vsel %vm116, %v65, 0.0
    %291 = vadd.xlane.f32.xlu0 %v290
    %v292 = vpop.xlane.xlu0 %291
    %v293 = vmul.f32 %v247, 0.125
    %v294 = vmul.f32 %v250, 0.125
    %v295 = vmul.f32 %v253, 0.125
    %v296 = vmul.f32 %v256, 0.125
    %v297 = vmul.f32 %v259, 0.125
    %v298 = vmul.f32 %v262, 0.125
    %v299 = vmul.f32 %v265, 0.125
    %v300 = vmul.f32 %v268, 0.125
    %v301 = vmul.f32 %v271, 0.125
    %v302 = vmul.f32 %v274, 0.125
    %v303 = vmul.f32 %v277, 0.125
    %v304 = vmul.f32 %v280, 0.125
    %v305 = vmul.f32 %v283, 0.125
    %v306 = vmul.f32 %v286, 0.125
    %v307 = vmul.f32 %v289, 0.125
    %v308 = vmul.f32 %v292, 0.125
    %v309 = vsel %vm116, %v66, 0.0
    %310 = vadd.xlane.f32.xlu0 %v309
    %v311 = vpop.xlane.xlu0 %310
    %v312 = vsel %vm116, %v67, 0.0
    %313 = vadd.xlane.f32.xlu0 %v312
    %v314 = vpop.xlane.xlu0 %313
    %v315 = vsel %vm116, %v68, 0.0
    %316 = vadd.xlane.f32.xlu0 %v315
    %v317 = vpop.xlane.xlu0 %316
    %v318 = vsel %vm116, %v69, 0.0
    %319 = vadd.xlane.f32.xlu0 %v318
    %v320 = vpop.xlane.xlu0 %319
    %v321 = vsel %vm116, %v70, 0.0
    %322 = vadd.xlane.f32.xlu0 %v321
    %v323 = vpop.xlane.xlu0 %322
    %v324 = vsel %vm116, %v71, 0.0
    %325 = vadd.xlane.f32.xlu0 %v324
    %v326 = vpop.xlane.xlu0 %325
    %v327 = vsel %vm116, %v72, 0.0
    %328 = vadd.xlane.f32.xlu0 %v327
    %v329 = vpop.xlane.xlu0 %328
    %v330 = vsel %vm116, %v73, 0.0
    %331 = vadd.xlane.f32.xlu0 %v330
    %v332 = vpop.xlane.xlu0 %331
    %v333 = vsel %vm116, %v74, 0.0
    %334 = vadd.xlane.f32.xlu0 %v333
    %v335 = vpop.xlane.xlu0 %334
    %v336 = vsel %vm116, %v75, 0.0
    %337 = vadd.xlane.f32.xlu0 %v336
    %v338 = vpop.xlane.xlu0 %337
    %v339 = vsel %vm116, %v76, 0.0
    %340 = vadd.xlane.f32.xlu0 %v339
    %v341 = vpop.xlane.xlu0 %340
    %v342 = vsel %vm116, %v77, 0.0
    %343 = vadd.xlane.f32.xlu0 %v342
    %v344 = vpop.xlane.xlu0 %343
    %v345 = vsel %vm116, %v78, 0.0
    %346 = vadd.xlane.f32.xlu0 %v345
    %v347 = vpop.xlane.xlu0 %346
    %v348 = vsel %vm116, %v79, 0.0
    %349 = vadd.xlane.f32.xlu0 %v348
    %v350 = vpop.xlane.xlu0 %349
    %v351 = vsel %vm116, %v80, 0.0
    %352 = vadd.xlane.f32.xlu0 %v351
    %v353 = vpop.xlane.xlu0 %352
    %v354 = vsel %vm116, %v81, 0.0
    %355 = vadd.xlane.f32.xlu0 %v354
    %v356 = vpop.xlane.xlu0 %355
    %v357 = vmul.f32 %v311, 0.125
    %v358 = vmul.f32 %v314, 0.125
    %v359 = vmul.f32 %v317, 0.125
    %v360 = vmul.f32 %v320, 0.125
    %v361 = vmul.f32 %v323, 0.125
    %v362 = vmul.f32 %v326, 0.125
    %v363 = vmul.f32 %v329, 0.125
    %v364 = vmul.f32 %v332, 0.125
    %v365 = vmul.f32 %v335, 0.125
    %v366 = vmul.f32 %v338, 0.125
    %v367 = vmul.f32 %v341, 0.125
    %v368 = vmul.f32 %v344, 0.125
    %v369 = vmul.f32 %v347, 0.125
    %v370 = vmul.f32 %v350, 0.125
    %v371 = vmul.f32 %v353, 0.125
    %v372 = vmul.f32 %v356, 0.125
    %v373 = vsel %vm116, %v83, 0.0
    %374 = vadd.xlane.f32.xlu0 %v373
    %v375 = vpop.xlane.xlu0 %374
    %v376 = vsel %vm116, %v84, 0.0
    %377 = vadd.xlane.f32.xlu0 %v376
    %v378 = vpop.xlane.xlu0 %377
    %v379 = vsel %vm116, %v85, 0.0
    %380 = vadd.xlane.f32.xlu0 %v379
    %v381 = vpop.xlane.xlu0 %380
    %v382 = vsel %vm116, %v86, 0.0
    %383 = vadd.xlane.f32.xlu0 %v382
    %v384 = vpop.xlane.xlu0 %383
    %v385 = vsel %vm116, %v87, 0.0
    %386 = vadd.xlane.f32.xlu0 %v385
    %v387 = vpop.xlane.xlu0 %386
    %v388 = vsel %vm116, %v88, 0.0
    %389 = vadd.xlane.f32.xlu0 %v388
    %v390 = vpop.xlane.xlu0 %389
    %v391 = vsel %vm116, %v89, 0.0
    %392 = vadd.xlane.f32.xlu0 %v391
    %v393 = vpop.xlane.xlu0 %392
    %v394 = vsel %vm116, %v90, 0.0
    %395 = vadd.xlane.f32.xlu0 %v394
    %v396 = vpop.xlane.xlu0 %395
    %v397 = vsel %vm116, %v91, 0.0
    %398 = vadd.xlane.f32.xlu0 %v397
    %v399 = vpop.xlane.xlu0 %398
    %v400 = vsel %vm116, %v92, 0.0
    %401 = vadd.xlane.f32.xlu0 %v400
    %v402 = vpop.xlane.xlu0 %401
    %v403 = vsel %vm116, %v93, 0.0
    %404 = vadd.xlane.f32.xlu0 %v403
    %v405 = vpop.xlane.xlu0 %404
    %v406 = vsel %vm116, %v94, 0.0
    %407 = vadd.xlane.f32.xlu0 %v406
    %v408 = vpop.xlane.xlu0 %407
    %v409 = vsel %vm116, %v95, 0.0
    %410 = vadd.xlane.f32.xlu0 %v409
    %v411 = vpop.xlane.xlu0 %410
    %v412 = vsel %vm116, %v96, 0.0
    %413 = vadd.xlane.f32.xlu0 %v412
    %v414 = vpop.xlane.xlu0 %413
    %v415 = vsel %vm116, %v97, 0.0
    %416 = vadd.xlane.f32.xlu0 %v415
    %v417 = vpop.xlane.xlu0 %416
    %v418 = vsel %vm116, %v98, 0.0
    %419 = vadd.xlane.f32.xlu0 %v418
    %v420 = vpop.xlane.xlu0 %419
    %v421 = vmul.f32 %v375, 0.125
    %v422 = vmul.f32 %v378, 0.125
    %v423 = vmul.f32 %v381, 0.125
    %v424 = vmul.f32 %v384, 0.125
    %v425 = vmul.f32 %v387, 0.125
    %v426 = vmul.f32 %v390, 0.125
    %v427 = vmul.f32 %v393, 0.125
    %v428 = vmul.f32 %v396, 0.125
    %v429 = vmul.f32 %v399, 0.125
    %v430 = vmul.f32 %v402, 0.125
    %v431 = vmul.f32 %v405, 0.125
    %v432 = vmul.f32 %v408, 0.125
    %v433 = vmul.f32 %v411, 0.125
    %v434 = vmul.f32 %v414, 0.125
    %v435 = vmul.f32 %v417, 0.125
    %v436 = vmul.f32 %v420, 0.125
    %v437 = vsel %vm116, %v100, 0.0
    %438 = vadd.xlane.f32.xlu0 %v437
    %v439 = vpop.xlane.xlu0 %438
    %v440 = vsel %vm116, %v101, 0.0
    %441 = vadd.xlane.f32.xlu0 %v440
    %v442 = vpop.xlane.xlu0 %441
    %v443 = vsel %vm116, %v102, 0.0
    %444 = vadd.xlane.f32.xlu0 %v443
    %v445 = vpop.xlane.xlu0 %444
    %v446 = vsel %vm116, %v103, 0.0
    %447 = vadd.xlane.f32.xlu0 %v446
    %v448 = vpop.xlane.xlu0 %447
    %v449 = vsel %vm116, %v104, 0.0
    %450 = vadd.xlane.f32.xlu0 %v449
    %v451 = vpop.xlane.xlu0 %450
    %v452 = vsel %vm116, %v105, 0.0
    %453 = vadd.xlane.f32.xlu0 %v452
    %v454 = vpop.xlane.xlu0 %453
    %v455 = vsel %vm116, %v106, 0.0
    %456 = vadd.xlane.f32.xlu0 %v455
    %v457 = vpop.xlane.xlu0 %456
    %v458 = vsel %vm116, %v107, 0.0
    %459 = vadd.xlane.f32.xlu0 %v458
    %v460 = vpop.xlane.xlu0 %459
    %v461 = vsel %vm116, %v108, 0.0
    %462 = vadd.xlane.f32.xlu0 %v461
    %v463 = vpop.xlane.xlu0 %462
    %v464 = vsel %vm116, %v109, 0.0
    %465 = vadd.xlane.f32.xlu0 %v464
    %v466 = vpop.xlane.xlu0 %465
    %v467 = vsel %vm116, %v110, 0.0
    %468 = vadd.xlane.f32.xlu0 %v467
    %v469 = vpop.xlane.xlu0 %468
    %v470 = vsel %vm116, %v111, 0.0
    %471 = vadd.xlane.f32.xlu0 %v470
    %v472 = vpop.xlane.xlu0 %471
    %v473 = vsel %vm116, %v112, 0.0
    %474 = vadd.xlane.f32.xlu0 %v473
    %v475 = vpop.xlane.xlu0 %474
    %v476 = vsel %vm116, %v113, 0.0
    %477 = vadd.xlane.f32.xlu0 %v476
    %v478 = vpop.xlane.xlu0 %477
    %v479 = vsel %vm116, %v114, 0.0
    %480 = vadd.xlane.f32.xlu0 %v479
    %v481 = vpop.xlane.xlu0 %480
    %v482 = vsel %vm116, %v115, 0.0
    %483 = vadd.xlane.f32.xlu0 %v482
    %v484 = vpop.xlane.xlu0 %483
    %v485 = vmul.f32 %v439, 0.125
    %v486 = vmul.f32 %v442, 0.125
    %v487 = vmul.f32 %v445, 0.125
    %v488 = vmul.f32 %v448, 0.125
    %v489 = vmul.f32 %v451, 0.125
    %v490 = vmul.f32 %v454, 0.125
    %v491 = vmul.f32 %v457, 0.125
    %v492 = vmul.f32 %v460, 0.125
    %v493 = vmul.f32 %v463, 0.125
    %v494 = vmul.f32 %v466, 0.125
    %v495 = vmul.f32 %v469, 0.125
    %v496 = vmul.f32 %v472, 0.125
    %v497 = vmul.f32 %v475, 0.125
    %v498 = vmul.f32 %v478, 0.125
    %v499 = vmul.f32 %v481, 0.125
    %v500 = vmul.f32 %v484, 0.125
    %v501 = vsub.f32 %v16, %v165
    %v502 = vsub.f32 %v17, %v166
    %v503 = vsub.f32 %v18, %v167
    %v504 = vsub.f32 %v19, %v168
    %v505 = vsub.f32 %v20, %v169
    %v506 = vsub.f32 %v21, %v170
    %v507 = vsub.f32 %v22, %v171
    %v508 = vsub.f32 %v23, %v172
    %v509 = vsub.f32 %v24, %v173
    %v510 = vsub.f32 %v25, %v174
    %v511 = vsub.f32 %v26, %v175
    %v512 = vsub.f32 %v27, %v176
    %v513 = vsub.f32 %v28, %v177
    %v514 = vsub.f32 %v29, %v178
    %v515 = vsub.f32 %v30, %v179
    %v516 = vsub.f32 %v31, %v180
    %v517 = vsub.f32 %v33, %v229
    %v518 = vsub.f32 %v34, %v230
    %v519 = vsub.f32 %v35, %v231
    %v520 = vsub.f32 %v36, %v232
    %v521 = vsub.f32 %v37, %v233
    %v522 = vsub.f32 %v38, %v234
    %v523 = vsub.f32 %v39, %v235
    %v524 = vsub.f32 %v40, %v236
    %v525 = vsub.f32 %v41, %v237
    %v526 = vsub.f32 %v42, %v238
    %v527 = vsub.f32 %v43, %v239
    %v528 = vsub.f32 %v44, %v240
    %v529 = vsub.f32 %v45, %v241
    %v530 = vsub.f32 %v46, %v242
    %v531 = vsub.f32 %v47, %v243
    %v532 = vsub.f32 %v48, %v244
    %v533 = vsub.f32 %v50, %v293
    %v534 = vsub.f32 %v51, %v294
    %v535 = vsub.f32 %v52, %v295
    %v536 = vsub.f32 %v53, %v296
    %v537 = vsub.f32 %v54, %v297
    %v538 = vsub.f32 %v55, %v298
    %v539 = vsub.f32 %v56, %v299
    %v540 = vsub.f32 %v57, %v300
    %v541 = vsub.f32 %v58, %v301
    %v542 = vsub.f32 %v59, %v302
    %v543 = vsub.f32 %v60, %v303
    %v544 = vsub.f32 %v61, %v304
    %v545 = vsub.f32 %v62, %v305
    %v546 = vsub.f32 %v63, %v306
    %v547 = vsub.f32 %v64, %v307
    %v548 = vsub.f32 %v65, %v308
    %v549 = vsub.f32 %v66, %v357
    %v550 = vsub.f32 %v67, %v358
    %v551 = vsub.f32 %v68, %v359
    %v552 = vsub.f32 %v69, %v360
    %v553 = vsub.f32 %v70, %v361
    %v554 = vsub.f32 %v71, %v362
    %v555 = vsub.f32 %v72, %v363
    %v556 = vsub.f32 %v73, %v364
    %v557 = vsub.f32 %v74, %v365
    %v558 = vsub.f32 %v75, %v366
    %v559 = vsub.f32 %v76, %v367
    %v560 = vsub.f32 %v77, %v368
    %v561 = vsub.f32 %v78, %v369
    %v562 = vsub.f32 %v79, %v370
    %v563 = vsub.f32 %v80, %v371
    %v564 = vsub.f32 %v81, %v372
    %v565 = vsub.f32 %v83, %v421
    %v566 = vsub.f32 %v84, %v422
    %v567 = vsub.f32 %v85, %v423
    %v568 = vsub.f32 %v86, %v424
    %v569 = vsub.f32 %v87, %v425
    %v570 = vsub.f32 %v88, %v426
    %v571 = vsub.f32 %v89, %v427
    %v572 = vsub.f32 %v90, %v428
    %v573 = vsub.f32 %v91, %v429
    %v574 = vsub.f32 %v92, %v430
    %v575 = vsub.f32 %v93, %v431
    %v576 = vsub.f32 %v94, %v432
    %v577 = vsub.f32 %v95, %v433
    %v578 = vsub.f32 %v96, %v434
    %v579 = vsub.f32 %v97, %v435
    %v580 = vsub.f32 %v98, %v436
    %v581 = vsub.f32 %v100, %v485
    %v582 = vsub.f32 %v101, %v486
    %v583 = vsub.f32 %v102, %v487
    %v584 = vsub.f32 %v103, %v488
    %v585 = vsub.f32 %v104, %v489
    %v586 = vsub.f32 %v105, %v490
    %v587 = vsub.f32 %v106, %v491
    %v588 = vsub.f32 %v107, %v492
    %v589 = vsub.f32 %v108, %v493
    %v590 = vsub.f32 %v109, %v494
    %v591 = vsub.f32 %v110, %v495
    %v592 = vsub.f32 %v111, %v496
    %v593 = vsub.f32 %v112, %v497
    %v594 = vsub.f32 %v113, %v498
    %v595 = vsub.f32 %v114, %v499
    %v596 = vsub.f32 %v115, %v500
    %v597 = vmul.f32 %v501, %v549
    %v598 = vmul.f32 %v502, %v550
    %v599 = vmul.f32 %v503, %v551
    %v600 = vmul.f32 %v504, %v552
    %v601 = vmul.f32 %v505, %v553
    %v602 = vmul.f32 %v506, %v554
    %v603 = vmul.f32 %v507, %v555
    %v604 = vmul.f32 %v508, %v556
    %v605 = vmul.f32 %v509, %v557
    %v606 = vmul.f32 %v510, %v558
    %v607 = vmul.f32 %v511, %v559
    %v608 = vmul.f32 %v512, %v560
    %v609 = vmul.f32 %v513, %v561
    %v610 = vmul.f32 %v514, %v562
    %v611 = vmul.f32 %v515, %v563
    %v612 = vmul.f32 %v516, %v564
    %v613 = vsel %vm116, %v597, 0.0
    %614 = vadd.xlane.f32.xlu0 %v613
    %v615 = vpop.xlane.xlu0 %614
    %v616 = vsel %vm116, %v598, 0.0
    %617 = vadd.xlane.f32.xlu0 %v616
    %v618 = vpop.xlane.xlu0 %617
    %v619 = vsel %vm116, %v599, 0.0
    %620 = vadd.xlane.f32.xlu0 %v619
    %v621 = vpop.xlane.xlu0 %620
    %v622 = vsel %vm116, %v600, 0.0
    %623 = vadd.xlane.f32.xlu0 %v622
    %v624 = vpop.xlane.xlu0 %623
    %v625 = vsel %vm116, %v601, 0.0
    %626 = vadd.xlane.f32.xlu0 %v625
    %v627 = vpop.xlane.xlu0 %626
    %v628 = vsel %vm116, %v602, 0.0
    %629 = vadd.xlane.f32.xlu0 %v628
    %v630 = vpop.xlane.xlu0 %629
    %v631 = vsel %vm116, %v603, 0.0
    %632 = vadd.xlane.f32.xlu0 %v631
    %v633 = vpop.xlane.xlu0 %632
    %v634 = vsel %vm116, %v604, 0.0
    %635 = vadd.xlane.f32.xlu0 %v634
    %v636 = vpop.xlane.xlu0 %635
    %v637 = vsel %vm116, %v605, 0.0
    %638 = vadd.xlane.f32.xlu0 %v637
    %v639 = vpop.xlane.xlu0 %638
    %v640 = vsel %vm116, %v606, 0.0
    %641 = vadd.xlane.f32.xlu0 %v640
    %v642 = vpop.xlane.xlu0 %641
    %v643 = vsel %vm116, %v607, 0.0
    %644 = vadd.xlane.f32.xlu0 %v643
    %v645 = vpop.xlane.xlu0 %644
    %v646 = vsel %vm116, %v608, 0.0
    %647 = vadd.xlane.f32.xlu0 %v646
    %v648 = vpop.xlane.xlu0 %647
    %v649 = vsel %vm116, %v609, 0.0
    %650 = vadd.xlane.f32.xlu0 %v649
    %v651 = vpop.xlane.xlu0 %650
    %v652 = vsel %vm116, %v610, 0.0
    %653 = vadd.xlane.f32.xlu0 %v652
    %v654 = vpop.xlane.xlu0 %653
    %v655 = vsel %vm116, %v611, 0.0
    %656 = vadd.xlane.f32.xlu0 %v655
    %v657 = vpop.xlane.xlu0 %656
    %v658 = vsel %vm116, %v612, 0.0
    %659 = vadd.xlane.f32.xlu0 %v658
    %v660 = vpop.xlane.xlu0 %659
    %v661 = vmul.f32 %v501, %v565
    %v662 = vmul.f32 %v502, %v566
    %v663 = vmul.f32 %v503, %v567
    %v664 = vmul.f32 %v504, %v568
    %v665 = vmul.f32 %v505, %v569
    %v666 = vmul.f32 %v506, %v570
    %v667 = vmul.f32 %v507, %v571
    %v668 = vmul.f32 %v508, %v572
    %v669 = vmul.f32 %v509, %v573
    %v670 = vmul.f32 %v510, %v574
    %v671 = vmul.f32 %v511, %v575
    %v672 = vmul.f32 %v512, %v576
    %v673 = vmul.f32 %v513, %v577
    %v674 = vmul.f32 %v514, %v578
    %v675 = vmul.f32 %v515, %v579
    %v676 = vmul.f32 %v516, %v580
    %v677 = vsel %vm116, %v661, 0.0
    %678 = vadd.xlane.f32.xlu0 %v677
    %v679 = vpop.xlane.xlu0 %678
    %v680 = vsel %vm116, %v662, 0.0
    %681 = vadd.xlane.f32.xlu0 %v680
    %v682 = vpop.xlane.xlu0 %681
    %v683 = vsel %vm116, %v663, 0.0
    %684 = vadd.xlane.f32.xlu0 %v683
    %v685 = vpop.xlane.xlu0 %684
    %v686 = vsel %vm116, %v664, 0.0
    %687 = vadd.xlane.f32.xlu0 %v686
    %v688 = vpop.xlane.xlu0 %687
    %v689 = vsel %vm116, %v665, 0.0
    %690 = vadd.xlane.f32.xlu0 %v689
    %v691 = vpop.xlane.xlu0 %690
    %v692 = vsel %vm116, %v666, 0.0
    %693 = vadd.xlane.f32.xlu0 %v692
    %v694 = vpop.xlane.xlu0 %693
    %v695 = vsel %vm116, %v667, 0.0
    %696 = vadd.xlane.f32.xlu0 %v695
    %v697 = vpop.xlane.xlu0 %696
    %v698 = vsel %vm116, %v668, 0.0
    %699 = vadd.xlane.f32.xlu0 %v698
    %v700 = vpop.xlane.xlu0 %699
    %v701 = vsel %vm116, %v669, 0.0
    %702 = vadd.xlane.f32.xlu0 %v701
    %v703 = vpop.xlane.xlu0 %702
    %v704 = vsel %vm116, %v670, 0.0
    %705 = vadd.xlane.f32.xlu0 %v704
    %v706 = vpop.xlane.xlu0 %705
    %v707 = vsel %vm116, %v671, 0.0
    %708 = vadd.xlane.f32.xlu0 %v707
    %v709 = vpop.xlane.xlu0 %708
    %v710 = vsel %vm116, %v672, 0.0
    %711 = vadd.xlane.f32.xlu0 %v710
    %v712 = vpop.xlane.xlu0 %711
    %v713 = vsel %vm116, %v673, 0.0
    %714 = vadd.xlane.f32.xlu0 %v713
    %v715 = vpop.xlane.xlu0 %714
    %v716 = vsel %vm116, %v674, 0.0
    %717 = vadd.xlane.f32.xlu0 %v716
    %v718 = vpop.xlane.xlu0 %717
    %v719 = vsel %vm116, %v675, 0.0
    %720 = vadd.xlane.f32.xlu0 %v719
    %v721 = vpop.xlane.xlu0 %720
    %v722 = vsel %vm116, %v676, 0.0
    %723 = vadd.xlane.f32.xlu0 %v722
    %v724 = vpop.xlane.xlu0 %723
    %v725 = vmul.f32 %v501, %v581
    %v726 = vmul.f32 %v502, %v582
    %v727 = vmul.f32 %v503, %v583
    %v728 = vmul.f32 %v504, %v584
    %v729 = vmul.f32 %v505, %v585
    %v730 = vmul.f32 %v506, %v586
    %v731 = vmul.f32 %v507, %v587
    %v732 = vmul.f32 %v508, %v588
    %v733 = vmul.f32 %v509, %v589
    %v734 = vmul.f32 %v510, %v590
    %v735 = vmul.f32 %v511, %v591
    %v736 = vmul.f32 %v512, %v592
    %v737 = vmul.f32 %v513, %v593
    %v738 = vmul.f32 %v514, %v594
    %v739 = vmul.f32 %v515, %v595
    %v740 = vmul.f32 %v516, %v596
    %v741 = vsel %vm116, %v725, 0.0
    %742 = vadd.xlane.f32.xlu0 %v741
    %v743 = vpop.xlane.xlu0 %742
    %v744 = vsel %vm116, %v726, 0.0
    %745 = vadd.xlane.f32.xlu0 %v744
    %v746 = vpop.xlane.xlu0 %745
    %v747 = vsel %vm116, %v727, 0.0
    %748 = vadd.xlane.f32.xlu0 %v747
    %v749 = vpop.xlane.xlu0 %748
    %v750 = vsel %vm116, %v728, 0.0
    %751 = vadd.xlane.f32.xlu0 %v750
    %v752 = vpop.xlane.xlu0 %751
    %v753 = vsel %vm116, %v729, 0.0
    %754 = vadd.xlane.f32.xlu0 %v753
    %v755 = vpop.xlane.xlu0 %754
    %v756 = vsel %vm116, %v730, 0.0
    %757 = vadd.xlane.f32.xlu0 %v756
    %v758 = vpop.xlane.xlu0 %757
    %v759 = vsel %vm116, %v731, 0.0
    %760 = vadd.xlane.f32.xlu0 %v759
    %v761 = vpop.xlane.xlu0 %760
    %v762 = vsel %vm116, %v732, 0.0
    %763 = vadd.xlane.f32.xlu0 %v762
    %v764 = vpop.xlane.xlu0 %763
    %v765 = vsel %vm116, %v733, 0.0
    %766 = vadd.xlane.f32.xlu0 %v765
    %v767 = vpop.xlane.xlu0 %766
    %v768 = vsel %vm116, %v734, 0.0
    %769 = vadd.xlane.f32.xlu0 %v768
    %v770 = vpop.xlane.xlu0 %769
    %v771 = vsel %vm116, %v735, 0.0
    %772 = vadd.xlane.f32.xlu0 %v771
    %v773 = vpop.xlane.xlu0 %772
    %v774 = vsel %vm116, %v736, 0.0
    %775 = vadd.xlane.f32.xlu0 %v774
    %v776 = vpop.xlane.xlu0 %775
    %v777 = vsel %vm116, %v737, 0.0
    %778 = vadd.xlane.f32.xlu0 %v777
    %v779 = vpop.xlane.xlu0 %778
    %v780 = vsel %vm116, %v738, 0.0
    %781 = vadd.xlane.f32.xlu0 %v780
    %v782 = vpop.xlane.xlu0 %781
    %v783 = vsel %vm116, %v739, 0.0
    %784 = vadd.xlane.f32.xlu0 %v783
    %v785 = vpop.xlane.xlu0 %784
    %v786 = vsel %vm116, %v740, 0.0
    %787 = vadd.xlane.f32.xlu0 %v786
    %v788 = vpop.xlane.xlu0 %787
    %v789 = vmul.f32 %v517, %v549
    %v790 = vmul.f32 %v518, %v550
    %v791 = vmul.f32 %v519, %v551
    %v792 = vmul.f32 %v520, %v552
    %v793 = vmul.f32 %v521, %v553
    %v794 = vmul.f32 %v522, %v554
    %v795 = vmul.f32 %v523, %v555
    %v796 = vmul.f32 %v524, %v556
    %v797 = vmul.f32 %v525, %v557
    %v798 = vmul.f32 %v526, %v558
    %v799 = vmul.f32 %v527, %v559
    %v800 = vmul.f32 %v528, %v560
    %v801 = vmul.f32 %v529, %v561
    %v802 = vmul.f32 %v530, %v562
    %v803 = vmul.f32 %v531, %v563
    %v804 = vmul.f32 %v532, %v564
    %v805 = vsel %vm116, %v789, 0.0
    %806 = vadd.xlane.f32.xlu0 %v805
    %v807 = vpop.xlane.xlu0 %806
    %v808 = vsel %vm116, %v790, 0.0
    %809 = vadd.xlane.f32.xlu0 %v808
    %v810 = vpop.xlane.xlu0 %809
    %v811 = vsel %vm116, %v791, 0.0
    %812 = vadd.xlane.f32.xlu0 %v811
    %v813 = vpop.xlane.xlu0 %812
    %v814 = vsel %vm116, %v792, 0.0
    %815 = vadd.xlane.f32.xlu0 %v814
    %v816 = vpop.xlane.xlu0 %815
    %v817 = vsel %vm116, %v793, 0.0
    %818 = vadd.xlane.f32.xlu0 %v817
    %v819 = vpop.xlane.xlu0 %818
    %v820 = vsel %vm116, %v794, 0.0
    %821 = vadd.xlane.f32.xlu0 %v820
    %v822 = vpop.xlane.xlu0 %821
    %v823 = vsel %vm116, %v795, 0.0
    %824 = vadd.xlane.f32.xlu0 %v823
    %v825 = vpop.xlane.xlu0 %824
    %v826 = vsel %vm116, %v796, 0.0
    %827 = vadd.xlane.f32.xlu0 %v826
    %v828 = vpop.xlane.xlu0 %827
    %v829 = vsel %vm116, %v797, 0.0
    %830 = vadd.xlane.f32.xlu0 %v829
    %v831 = vpop.xlane.xlu0 %830
    %v832 = vsel %vm116, %v798, 0.0
    %833 = vadd.xlane.f32.xlu0 %v832
    %v834 = vpop.xlane.xlu0 %833
    %v835 = vsel %vm116, %v799, 0.0
    %836 = vadd.xlane.f32.xlu0 %v835
    %v837 = vpop.xlane.xlu0 %836
    %v838 = vsel %vm116, %v800, 0.0
    %839 = vadd.xlane.f32.xlu0 %v838
    %v840 = vpop.xlane.xlu0 %839
    %v841 = vsel %vm116, %v801, 0.0
    %842 = vadd.xlane.f32.xlu0 %v841
    %v843 = vpop.xlane.xlu0 %842
    %v844 = vsel %vm116, %v802, 0.0
    %845 = vadd.xlane.f32.xlu0 %v844
    %v846 = vpop.xlane.xlu0 %845
    %v847 = vsel %vm116, %v803, 0.0
    %848 = vadd.xlane.f32.xlu0 %v847
    %v849 = vpop.xlane.xlu0 %848
    %v850 = vsel %vm116, %v804, 0.0
    %851 = vadd.xlane.f32.xlu0 %v850
    %v852 = vpop.xlane.xlu0 %851
    %v853 = vmul.f32 %v517, %v565
    %v854 = vmul.f32 %v518, %v566
    %v855 = vmul.f32 %v519, %v567
    %v856 = vmul.f32 %v520, %v568
    %v857 = vmul.f32 %v521, %v569
    %v858 = vmul.f32 %v522, %v570
    %v859 = vmul.f32 %v523, %v571
    %v860 = vmul.f32 %v524, %v572
    %v861 = vmul.f32 %v525, %v573
    %v862 = vmul.f32 %v526, %v574
    %v863 = vmul.f32 %v527, %v575
    %v864 = vmul.f32 %v528, %v576
    %v865 = vmul.f32 %v529, %v577
    %v866 = vmul.f32 %v530, %v578
    %v867 = vmul.f32 %v531, %v579
    %v868 = vmul.f32 %v532, %v580
    %v869 = vsel %vm116, %v853, 0.0
    %870 = vadd.xlane.f32.xlu0 %v869
    %v871 = vpop.xlane.xlu0 %870
    %v872 = vsel %vm116, %v854, 0.0
    %873 = vadd.xlane.f32.xlu0 %v872
    %v874 = vpop.xlane.xlu0 %873
    %v875 = vsel %vm116, %v855, 0.0
    %876 = vadd.xlane.f32.xlu0 %v875
    %v877 = vpop.xlane.xlu0 %876
    %v878 = vsel %vm116, %v856, 0.0
    %879 = vadd.xlane.f32.xlu0 %v878
    %v880 = vpop.xlane.xlu0 %879
    %v881 = vsel %vm116, %v857, 0.0
    %882 = vadd.xlane.f32.xlu0 %v881
    %v883 = vpop.xlane.xlu0 %882
    %v884 = vsel %vm116, %v858, 0.0
    %885 = vadd.xlane.f32.xlu0 %v884
    %v886 = vpop.xlane.xlu0 %885
    %v887 = vsel %vm116, %v859, 0.0
    %888 = vadd.xlane.f32.xlu0 %v887
    %v889 = vpop.xlane.xlu0 %888
    %v890 = vsel %vm116, %v860, 0.0
    %891 = vadd.xlane.f32.xlu0 %v890
    %v892 = vpop.xlane.xlu0 %891
    %v893 = vsel %vm116, %v861, 0.0
    %894 = vadd.xlane.f32.xlu0 %v893
    %v895 = vpop.xlane.xlu0 %894
    %v896 = vsel %vm116, %v862, 0.0
    %897 = vadd.xlane.f32.xlu0 %v896
    %v898 = vpop.xlane.xlu0 %897
    %v899 = vsel %vm116, %v863, 0.0
    %900 = vadd.xlane.f32.xlu0 %v899
    %v901 = vpop.xlane.xlu0 %900
    %v902 = vsel %vm116, %v864, 0.0
    %903 = vadd.xlane.f32.xlu0 %v902
    %v904 = vpop.xlane.xlu0 %903
    %v905 = vsel %vm116, %v865, 0.0
    %906 = vadd.xlane.f32.xlu0 %v905
    %v907 = vpop.xlane.xlu0 %906
    %v908 = vsel %vm116, %v866, 0.0
    %909 = vadd.xlane.f32.xlu0 %v908
    %v910 = vpop.xlane.xlu0 %909
    %v911 = vsel %vm116, %v867, 0.0
    %912 = vadd.xlane.f32.xlu0 %v911
    %v913 = vpop.xlane.xlu0 %912
    %v914 = vsel %vm116, %v868, 0.0
    %915 = vadd.xlane.f32.xlu0 %v914
    %v916 = vpop.xlane.xlu0 %915
    %v917 = vmul.f32 %v517, %v581
    %v918 = vmul.f32 %v518, %v582
    %v919 = vmul.f32 %v519, %v583
    %v920 = vmul.f32 %v520, %v584
    %v921 = vmul.f32 %v521, %v585
    %v922 = vmul.f32 %v522, %v586
    %v923 = vmul.f32 %v523, %v587
    %v924 = vmul.f32 %v524, %v588
    %v925 = vmul.f32 %v525, %v589
    %v926 = vmul.f32 %v526, %v590
    %v927 = vmul.f32 %v527, %v591
    %v928 = vmul.f32 %v528, %v592
    %v929 = vmul.f32 %v529, %v593
    %v930 = vmul.f32 %v530, %v594
    %v931 = vmul.f32 %v531, %v595
    %v932 = vmul.f32 %v532, %v596
    %v933 = vsel %vm116, %v917, 0.0
    %934 = vadd.xlane.f32.xlu0 %v933
    %v935 = vpop.xlane.xlu0 %934
    %v936 = vsel %vm116, %v918, 0.0
    %937 = vadd.xlane.f32.xlu0 %v936
    %v938 = vpop.xlane.xlu0 %937
    %v939 = vsel %vm116, %v919, 0.0
    %940 = vadd.xlane.f32.xlu0 %v939
    %v941 = vpop.xlane.xlu0 %940
    %v942 = vsel %vm116, %v920, 0.0
    %943 = vadd.xlane.f32.xlu0 %v942
    %v944 = vpop.xlane.xlu0 %943
    %v945 = vsel %vm116, %v921, 0.0
    %946 = vadd.xlane.f32.xlu0 %v945
    %v947 = vpop.xlane.xlu0 %946
    %v948 = vsel %vm116, %v922, 0.0
    %949 = vadd.xlane.f32.xlu0 %v948
    %v950 = vpop.xlane.xlu0 %949
    %v951 = vsel %vm116, %v923, 0.0
    %952 = vadd.xlane.f32.xlu0 %v951
    %v953 = vpop.xlane.xlu0 %952
    %v954 = vsel %vm116, %v924, 0.0
    %955 = vadd.xlane.f32.xlu0 %v954
    %v956 = vpop.xlane.xlu0 %955
    %v957 = vsel %vm116, %v925, 0.0
    %958 = vadd.xlane.f32.xlu0 %v957
    %v959 = vpop.xlane.xlu0 %958
    %v960 = vsel %vm116, %v926, 0.0
    %961 = vadd.xlane.f32.xlu0 %v960
    %v962 = vpop.xlane.xlu0 %961
    %v963 = vsel %vm116, %v927, 0.0
    %964 = vadd.xlane.f32.xlu0 %v963
    %v965 = vpop.xlane.xlu0 %964
    %v966 = vsel %vm116, %v928, 0.0
    %967 = vadd.xlane.f32.xlu0 %v966
    %v968 = vpop.xlane.xlu0 %967
    %v969 = vsel %vm116, %v929, 0.0
    %970 = vadd.xlane.f32.xlu0 %v969
    %v971 = vpop.xlane.xlu0 %970
    %v972 = vsel %vm116, %v930, 0.0
    %973 = vadd.xlane.f32.xlu0 %v972
    %v974 = vpop.xlane.xlu0 %973
    %v975 = vsel %vm116, %v931, 0.0
    %976 = vadd.xlane.f32.xlu0 %v975
    %v977 = vpop.xlane.xlu0 %976
    %v978 = vsel %vm116, %v932, 0.0
    %979 = vadd.xlane.f32.xlu0 %v978
    %v980 = vpop.xlane.xlu0 %979
    %v981 = vmul.f32 %v533, %v549
    %v982 = vmul.f32 %v534, %v550
    %v983 = vmul.f32 %v535, %v551
    %v984 = vmul.f32 %v536, %v552
    %v985 = vmul.f32 %v537, %v553
    %v986 = vmul.f32 %v538, %v554
    %v987 = vmul.f32 %v539, %v555
    %v988 = vmul.f32 %v540, %v556
    %v989 = vmul.f32 %v541, %v557
    %v990 = vmul.f32 %v542, %v558
    %v991 = vmul.f32 %v543, %v559
    %v992 = vmul.f32 %v544, %v560
    %v993 = vmul.f32 %v545, %v561
    %v994 = vmul.f32 %v546, %v562
    %v995 = vmul.f32 %v547, %v563
    %v996 = vmul.f32 %v548, %v564
    %v997 = vsel %vm116, %v981, 0.0
    %998 = vadd.xlane.f32.xlu0 %v997
    %v999 = vpop.xlane.xlu0 %998
    %v1000 = vsel %vm116, %v982, 0.0
    %1001 = vadd.xlane.f32.xlu0 %v1000
    %v1002 = vpop.xlane.xlu0 %1001
    %v1003 = vsel %vm116, %v983, 0.0
    %1004 = vadd.xlane.f32.xlu0 %v1003
    %v1005 = vpop.xlane.xlu0 %1004
    %v1006 = vsel %vm116, %v984, 0.0
    %1007 = vadd.xlane.f32.xlu0 %v1006
    %v1008 = vpop.xlane.xlu0 %1007
    %v1009 = vsel %vm116, %v985, 0.0
    %1010 = vadd.xlane.f32.xlu0 %v1009
    %v1011 = vpop.xlane.xlu0 %1010
    %v1012 = vsel %vm116, %v986, 0.0
    %1013 = vadd.xlane.f32.xlu0 %v1012
    %v1014 = vpop.xlane.xlu0 %1013
    %v1015 = vsel %vm116, %v987, 0.0
    %1016 = vadd.xlane.f32.xlu0 %v1015
    %v1017 = vpop.xlane.xlu0 %1016
    %v1018 = vsel %vm116, %v988, 0.0
    %1019 = vadd.xlane.f32.xlu0 %v1018
    %v1020 = vpop.xlane.xlu0 %1019
    %v1021 = vsel %vm116, %v989, 0.0
    %1022 = vadd.xlane.f32.xlu0 %v1021
    %v1023 = vpop.xlane.xlu0 %1022
    %v1024 = vsel %vm116, %v990, 0.0
    %1025 = vadd.xlane.f32.xlu0 %v1024
    %v1026 = vpop.xlane.xlu0 %1025
    %v1027 = vsel %vm116, %v991, 0.0
    %1028 = vadd.xlane.f32.xlu0 %v1027
    %v1029 = vpop.xlane.xlu0 %1028
    %v1030 = vsel %vm116, %v992, 0.0
    %1031 = vadd.xlane.f32.xlu0 %v1030
    %v1032 = vpop.xlane.xlu0 %1031
    %v1033 = vsel %vm116, %v993, 0.0
    %1034 = vadd.xlane.f32.xlu0 %v1033
    %v1035 = vpop.xlane.xlu0 %1034
    %v1036 = vsel %vm116, %v994, 0.0
    %1037 = vadd.xlane.f32.xlu0 %v1036
    %v1038 = vpop.xlane.xlu0 %1037
    %v1039 = vsel %vm116, %v995, 0.0
    %1040 = vadd.xlane.f32.xlu0 %v1039
    %v1041 = vpop.xlane.xlu0 %1040
    %v1042 = vsel %vm116, %v996, 0.0
    %1043 = vadd.xlane.f32.xlu0 %v1042
    %v1044 = vpop.xlane.xlu0 %1043
    %v1045 = vmul.f32 %v533, %v565
    %v1046 = vmul.f32 %v534, %v566
    %v1047 = vmul.f32 %v535, %v567
    %v1048 = vmul.f32 %v536, %v568
    %v1049 = vmul.f32 %v537, %v569
    %v1050 = vmul.f32 %v538, %v570
    %v1051 = vmul.f32 %v539, %v571
    %v1052 = vmul.f32 %v540, %v572
    %v1053 = vmul.f32 %v541, %v573
    %v1054 = vmul.f32 %v542, %v574
    %v1055 = vmul.f32 %v543, %v575
    %v1056 = vmul.f32 %v544, %v576
    %v1057 = vmul.f32 %v545, %v577
    %v1058 = vmul.f32 %v546, %v578
    %v1059 = vmul.f32 %v547, %v579
    %v1060 = vmul.f32 %v548, %v580
    %v1061 = vsel %vm116, %v1045, 0.0
    %1062 = vadd.xlane.f32.xlu0 %v1061
    %v1063 = vpop.xlane.xlu0 %1062
    %v1064 = vsel %vm116, %v1046, 0.0
    %1065 = vadd.xlane.f32.xlu0 %v1064
    %v1066 = vpop.xlane.xlu0 %1065
    %v1067 = vsel %vm116, %v1047, 0.0
    %1068 = vadd.xlane.f32.xlu0 %v1067
    %v1069 = vpop.xlane.xlu0 %1068
    %v1070 = vsel %vm116, %v1048, 0.0
    %1071 = vadd.xlane.f32.xlu0 %v1070
    %v1072 = vpop.xlane.xlu0 %1071
    %v1073 = vsel %vm116, %v1049, 0.0
    %1074 = vadd.xlane.f32.xlu0 %v1073
    %v1075 = vpop.xlane.xlu0 %1074
    %v1076 = vsel %vm116, %v1050, 0.0
    %1077 = vadd.xlane.f32.xlu0 %v1076
    %v1078 = vpop.xlane.xlu0 %1077
    %v1079 = vsel %vm116, %v1051, 0.0
    %1080 = vadd.xlane.f32.xlu0 %v1079
    %v1081 = vpop.xlane.xlu0 %1080
    %v1082 = vsel %vm116, %v1052, 0.0
    %1083 = vadd.xlane.f32.xlu0 %v1082
    %v1084 = vpop.xlane.xlu0 %1083
    %v1085 = vsel %vm116, %v1053, 0.0
    %1086 = vadd.xlane.f32.xlu0 %v1085
    %v1087 = vpop.xlane.xlu0 %1086
    %v1088 = vsel %vm116, %v1054, 0.0
    %1089 = vadd.xlane.f32.xlu0 %v1088
    %v1090 = vpop.xlane.xlu0 %1089
    %v1091 = vsel %vm116, %v1055, 0.0
    %1092 = vadd.xlane.f32.xlu0 %v1091
    %v1093 = vpop.xlane.xlu0 %1092
    %v1094 = vsel %vm116, %v1056, 0.0
    %1095 = vadd.xlane.f32.xlu0 %v1094
    %v1096 = vpop.xlane.xlu0 %1095
    %v1097 = vsel %vm116, %v1057, 0.0
    %1098 = vadd.xlane.f32.xlu0 %v1097
    %v1099 = vpop.xlane.xlu0 %1098
    %v1100 = vsel %vm116, %v1058, 0.0
    %1101 = vadd.xlane.f32.xlu0 %v1100
    %v1102 = vpop.xlane.xlu0 %1101
    %v1103 = vsel %vm116, %v1059, 0.0
    %1104 = vadd.xlane.f32.xlu0 %v1103
    %v1105 = vpop.xlane.xlu0 %1104
    %v1106 = vsel %vm116, %v1060, 0.0
    %1107 = vadd.xlane.f32.xlu0 %v1106
    %v1108 = vpop.xlane.xlu0 %1107
    %v1109 = vmul.f32 %v533, %v581
    %v1110 = vmul.f32 %v534, %v582
    %v1111 = vmul.f32 %v535, %v583
    %v1112 = vmul.f32 %v536, %v584
    %v1113 = vmul.f32 %v537, %v585
    %v1114 = vmul.f32 %v538, %v586
    %v1115 = vmul.f32 %v539, %v587
    %v1116 = vmul.f32 %v540, %v588
    %v1117 = vmul.f32 %v541, %v589
    %v1118 = vmul.f32 %v542, %v590
    %v1119 = vmul.f32 %v543, %v591
    %v1120 = vmul.f32 %v544, %v592
    %v1121 = vmul.f32 %v545, %v593
    %v1122 = vmul.f32 %v546, %v594
    %v1123 = vmul.f32 %v547, %v595
    %v1124 = vmul.f32 %v548, %v596
    %v1125 = vsel %vm116, %v1109, 0.0
    %1126 = vadd.xlane.f32.xlu0 %v1125
    %v1127 = vpop.xlane.xlu0 %1126
    %v1128 = vsel %vm116, %v1110, 0.0
    %1129 = vadd.xlane.f32.xlu0 %v1128
    %v1130 = vpop.xlane.xlu0 %1129
    %v1131 = vsel %vm116, %v1111, 0.0
    %1132 = vadd.xlane.f32.xlu0 %v1131
    %v1133 = vpop.xlane.xlu0 %1132
    %v1134 = vsel %vm116, %v1112, 0.0
    %1135 = vadd.xlane.f32.xlu0 %v1134
    %v1136 = vpop.xlane.xlu0 %1135
    %v1137 = vsel %vm116, %v1113, 0.0
    %1138 = vadd.xlane.f32.xlu0 %v1137
    %v1139 = vpop.xlane.xlu0 %1138
    %v1140 = vsel %vm116, %v1114, 0.0
    %1141 = vadd.xlane.f32.xlu0 %v1140
    %v1142 = vpop.xlane.xlu0 %1141
    %v1143 = vsel %vm116, %v1115, 0.0
    %1144 = vadd.xlane.f32.xlu0 %v1143
    %v1145 = vpop.xlane.xlu0 %1144
    %v1146 = vsel %vm116, %v1116, 0.0
    %1147 = vadd.xlane.f32.xlu0 %v1146
    %v1148 = vpop.xlane.xlu0 %1147
    %v1149 = vsel %vm116, %v1117, 0.0
    %1150 = vadd.xlane.f32.xlu0 %v1149
    %v1151 = vpop.xlane.xlu0 %1150
    %v1152 = vsel %vm116, %v1118, 0.0
    %1153 = vadd.xlane.f32.xlu0 %v1152
    %v1154 = vpop.xlane.xlu0 %1153
    %v1155 = vsel %vm116, %v1119, 0.0
    %1156 = vadd.xlane.f32.xlu0 %v1155
    %v1157 = vpop.xlane.xlu0 %1156
    %v1158 = vsel %vm116, %v1120, 0.0
    %1159 = vadd.xlane.f32.xlu0 %v1158
    %v1160 = vpop.xlane.xlu0 %1159
    %v1161 = vsel %vm116, %v1121, 0.0
    %1162 = vadd.xlane.f32.xlu0 %v1161
    %v1163 = vpop.xlane.xlu0 %1162
    %v1164 = vsel %vm116, %v1122, 0.0
    %1165 = vadd.xlane.f32.xlu0 %v1164
    %v1166 = vpop.xlane.xlu0 %1165
    %v1167 = vsel %vm116, %v1123, 0.0
    %1168 = vadd.xlane.f32.xlu0 %v1167
    %v1169 = vpop.xlane.xlu0 %1168
    %v1170 = vsel %vm116, %v1124, 0.0
    %1171 = vadd.xlane.f32.xlu0 %v1170
    %v1172 = vpop.xlane.xlu0 %1171
    %v1189 = vlaneseq
    %v1190 = vand.u32 %v1189, 127
    %v1191 = vperm.slane %v615, %v1190
    %v1192 = vadd.s32 %v1190, 4294967288
    %v1193 = vperm.slane %v618, %v1192
    %vm1194 = vcmask 130112
    %v1195 = vsel %vm1194, %v1193, %v1191
    %v1196 = vadd.s32 %v1190, 4294967280
    %v1197 = vperm.slane %v621, %v1196
    %vm1198 = vcmask 195712
    %v1199 = vsel %vm1198, %v1197, %v1195
    %v1200 = vadd.s32 %v1190, 4294967272
    %v1201 = vperm.slane %v624, %v1200
    %vm1202 = vcmask 261312
    %v1203 = vsel %vm1202, %v1201, %v1199
    %v1204 = vadd.s32 %v1190, 4294967264
    %v1205 = vperm.slane %v627, %v1204
    %vm1206 = vcmask 326912
    %v1207 = vsel %vm1206, %v1205, %v1203
    %v1208 = vadd.s32 %v1190, 4294967256
    %v1209 = vperm.slane %v630, %v1208
    %vm1210 = vcmask 392512
    %v1211 = vsel %vm1210, %v1209, %v1207
    %v1212 = vadd.s32 %v1190, 4294967248
    %v1213 = vperm.slane %v633, %v1212
    %vm1214 = vcmask 458112
    %v1215 = vsel %vm1214, %v1213, %v1211
    %v1216 = vadd.s32 %v1190, 4294967240
    %v1217 = vperm.slane %v636, %v1216
    %vm1218 = vcmask 523712
    %v1219 = vsel %vm1218, %v1217, %v1215
    %v1220 = vadd.s32 %v1190, 4294967232
    %v1221 = vperm.slane %v639, %v1220
    %vm1222 = vcmask 589312
    %v1223 = vsel %vm1222, %v1221, %v1219
    %v1224 = vadd.s32 %v1190, 4294967224
    %v1225 = vperm.slane %v642, %v1224
    %vm1226 = vcmask 654912
    %v1227 = vsel %vm1226, %v1225, %v1223
    %v1228 = vadd.s32 %v1190, 4294967216
    %v1229 = vperm.slane %v645, %v1228
    %vm1230 = vcmask 720512
    %v1231 = vsel %vm1230, %v1229, %v1227
    %v1232 = vadd.s32 %v1190, 4294967208
    %v1233 = vperm.slane %v648, %v1232
    %vm1234 = vcmask 786112
    %v1235 = vsel %vm1234, %v1233, %v1231
    %v1236 = vadd.s32 %v1190, 4294967200
    %v1237 = vperm.slane %v651, %v1236
    %vm1238 = vcmask 851712
    %v1239 = vsel %vm1238, %v1237, %v1235
    %v1240 = vadd.s32 %v1190, 4294967192
    %v1241 = vperm.slane %v654, %v1240
    %vm1242 = vcmask 917312
    %v1243 = vsel %vm1242, %v1241, %v1239
    %v1244 = vadd.s32 %v1190, 4294967184
    %v1245 = vperm.slane %v657, %v1244
    %vm1246 = vcmask 982912
    %v1247 = vsel %vm1246, %v1245, %v1243
    %v1248 = vadd.s32 %v1190, 4294967176
    %v1249 = vperm.slane %v660, %v1248
    %vm1250 = vcmask 1048512
    %v1251 = vsel %vm1250, %v1249, %v1247
    %v1269 = vperm.slane %v679, %v1190
    %v1270 = vperm.slane %v682, %v1192
    %v1271 = vsel %vm1194, %v1270, %v1269
    %v1272 = vperm.slane %v685, %v1196
    %v1273 = vsel %vm1198, %v1272, %v1271
    %v1274 = vperm.slane %v688, %v1200
    %v1275 = vsel %vm1202, %v1274, %v1273
    %v1276 = vperm.slane %v691, %v1204
    %v1277 = vsel %vm1206, %v1276, %v1275
    %v1278 = vperm.slane %v694, %v1208
    %v1279 = vsel %vm1210, %v1278, %v1277
    %v1280 = vperm.slane %v697, %v1212
    %v1281 = vsel %vm1214, %v1280, %v1279
    %v1282 = vperm.slane %v700, %v1216
    %v1283 = vsel %vm1218, %v1282, %v1281
    %v1284 = vperm.slane %v703, %v1220
    %v1285 = vsel %vm1222, %v1284, %v1283
    %v1286 = vperm.slane %v706, %v1224
    %v1287 = vsel %vm1226, %v1286, %v1285
    %v1288 = vperm.slane %v709, %v1228
    %v1289 = vsel %vm1230, %v1288, %v1287
    %v1290 = vperm.slane %v712, %v1232
    %v1291 = vsel %vm1234, %v1290, %v1289
    %v1292 = vperm.slane %v715, %v1236
    %v1293 = vsel %vm1238, %v1292, %v1291
    %v1294 = vperm.slane %v718, %v1240
    %v1295 = vsel %vm1242, %v1294, %v1293
    %v1296 = vperm.slane %v721, %v1244
    %v1297 = vsel %vm1246, %v1296, %v1295
    %v1298 = vperm.slane %v724, %v1248
    %v1299 = vsel %vm1250, %v1298, %v1297
    %v1317 = vperm.slane %v743, %v1190
    %v1318 = vperm.slane %v746, %v1192
    %v1319 = vsel %vm1194, %v1318, %v1317
    %v1320 = vperm.slane %v749, %v1196
    %v1321 = vsel %vm1198, %v1320, %v1319
    %v1322 = vperm.slane %v752, %v1200
    %v1323 = vsel %vm1202, %v1322, %v1321
    %v1324 = vperm.slane %v755, %v1204
    %v1325 = vsel %vm1206, %v1324, %v1323
    %v1326 = vperm.slane %v758, %v1208
    %v1327 = vsel %vm1210, %v1326, %v1325
    %v1328 = vperm.slane %v761, %v1212
    %v1329 = vsel %vm1214, %v1328, %v1327
    %v1330 = vperm.slane %v764, %v1216
    %v1331 = vsel %vm1218, %v1330, %v1329
    %v1332 = vperm.slane %v767, %v1220
    %v1333 = vsel %vm1222, %v1332, %v1331
    %v1334 = vperm.slane %v770, %v1224
    %v1335 = vsel %vm1226, %v1334, %v1333
    %v1336 = vperm.slane %v773, %v1228
    %v1337 = vsel %vm1230, %v1336, %v1335
    %v1338 = vperm.slane %v776, %v1232
    %v1339 = vsel %vm1234, %v1338, %v1337
    %v1340 = vperm.slane %v779, %v1236
    %v1341 = vsel %vm1238, %v1340, %v1339
    %v1342 = vperm.slane %v782, %v1240
    %v1343 = vsel %vm1242, %v1342, %v1341
    %v1344 = vperm.slane %v785, %v1244
    %v1345 = vsel %vm1246, %v1344, %v1343
    %v1346 = vperm.slane %v788, %v1248
    %v1347 = vsel %vm1250, %v1346, %v1345
    %v1365 = vperm.slane %v807, %v1190
    %v1366 = vperm.slane %v810, %v1192
    %v1367 = vsel %vm1194, %v1366, %v1365
    %v1368 = vperm.slane %v813, %v1196
    %v1369 = vsel %vm1198, %v1368, %v1367
    %v1370 = vperm.slane %v816, %v1200
    %v1371 = vsel %vm1202, %v1370, %v1369
    %v1372 = vperm.slane %v819, %v1204
    %v1373 = vsel %vm1206, %v1372, %v1371
    %v1374 = vperm.slane %v822, %v1208
    %v1375 = vsel %vm1210, %v1374, %v1373
    %v1376 = vperm.slane %v825, %v1212
    %v1377 = vsel %vm1214, %v1376, %v1375
    %v1378 = vperm.slane %v828, %v1216
    %v1379 = vsel %vm1218, %v1378, %v1377
    %v1380 = vperm.slane %v831, %v1220
    %v1381 = vsel %vm1222, %v1380, %v1379
    %v1382 = vperm.slane %v834, %v1224
    %v1383 = vsel %vm1226, %v1382, %v1381
    %v1384 = vperm.slane %v837, %v1228
    %v1385 = vsel %vm1230, %v1384, %v1383
    %v1386 = vperm.slane %v840, %v1232
    %v1387 = vsel %vm1234, %v1386, %v1385
    %v1388 = vperm.slane %v843, %v1236
    %v1389 = vsel %vm1238, %v1388, %v1387
    %v1390 = vperm.slane %v846, %v1240
    %v1391 = vsel %vm1242, %v1390, %v1389
    %v1392 = vperm.slane %v849, %v1244
    %v1393 = vsel %vm1246, %v1392, %v1391
    %v1394 = vperm.slane %v852, %v1248
    %v1395 = vsel %vm1250, %v1394, %v1393
    %v1413 = vperm.slane %v871, %v1190
    %v1414 = vperm.slane %v874, %v1192
    %v1415 = vsel %vm1194, %v1414, %v1413
    %v1416 = vperm.slane %v877, %v1196
    %v1417 = vsel %vm1198, %v1416, %v1415
    %v1418 = vperm.slane %v880, %v1200
    %v1419 = vsel %vm1202, %v1418, %v1417
    %v1420 = vperm.slane %v883, %v1204
    %v1421 = vsel %vm1206, %v1420, %v1419
    %v1422 = vperm.slane %v886, %v1208
    %v1423 = vsel %vm1210, %v1422, %v1421
    %v1424 = vperm.slane %v889, %v1212
    %v1425 = vsel %vm1214, %v1424, %v1423
    %v1426 = vperm.slane %v892, %v1216
    %v1427 = vsel %vm1218, %v1426, %v1425
    %v1428 = vperm.slane %v895, %v1220
    %v1429 = vsel %vm1222, %v1428, %v1427
    %v1430 = vperm.slane %v898, %v1224
    %v1431 = vsel %vm1226, %v1430, %v1429
    %v1432 = vperm.slane %v901, %v1228
    %v1433 = vsel %vm1230, %v1432, %v1431
    %v1434 = vperm.slane %v904, %v1232
    %v1435 = vsel %vm1234, %v1434, %v1433
    %v1436 = vperm.slane %v907, %v1236
    %v1437 = vsel %vm1238, %v1436, %v1435
    %v1438 = vperm.slane %v910, %v1240
    %v1439 = vsel %vm1242, %v1438, %v1437
    %v1440 = vperm.slane %v913, %v1244
    %v1441 = vsel %vm1246, %v1440, %v1439
    %v1442 = vperm.slane %v916, %v1248
    %v1443 = vsel %vm1250, %v1442, %v1441
    %v1461 = vperm.slane %v935, %v1190
    %v1462 = vperm.slane %v938, %v1192
    %v1463 = vsel %vm1194, %v1462, %v1461
    %v1464 = vperm.slane %v941, %v1196
    %v1465 = vsel %vm1198, %v1464, %v1463
    %v1466 = vperm.slane %v944, %v1200
    %v1467 = vsel %vm1202, %v1466, %v1465
    %v1468 = vperm.slane %v947, %v1204
    %v1469 = vsel %vm1206, %v1468, %v1467
    %v1470 = vperm.slane %v950, %v1208
    %v1471 = vsel %vm1210, %v1470, %v1469
    %v1472 = vperm.slane %v953, %v1212
    %v1473 = vsel %vm1214, %v1472, %v1471
    %v1474 = vperm.slane %v956, %v1216
    %v1475 = vsel %vm1218, %v1474, %v1473
    %v1476 = vperm.slane %v959, %v1220
    %v1477 = vsel %vm1222, %v1476, %v1475
    %v1478 = vperm.slane %v962, %v1224
    %v1479 = vsel %vm1226, %v1478, %v1477
    %v1480 = vperm.slane %v965, %v1228
    %v1481 = vsel %vm1230, %v1480, %v1479
    %v1482 = vperm.slane %v968, %v1232
    %v1483 = vsel %vm1234, %v1482, %v1481
    %v1484 = vperm.slane %v971, %v1236
    %v1485 = vsel %vm1238, %v1484, %v1483
    %v1486 = vperm.slane %v974, %v1240
    %v1487 = vsel %vm1242, %v1486, %v1485
    %v1488 = vperm.slane %v977, %v1244
    %v1489 = vsel %vm1246, %v1488, %v1487
    %v1490 = vperm.slane %v980, %v1248
    %v1491 = vsel %vm1250, %v1490, %v1489
    %v1509 = vperm.slane %v999, %v1190
    %v1510 = vperm.slane %v1002, %v1192
    %v1511 = vsel %vm1194, %v1510, %v1509
    %v1512 = vperm.slane %v1005, %v1196
    %v1513 = vsel %vm1198, %v1512, %v1511
    %v1514 = vperm.slane %v1008, %v1200
    %v1515 = vsel %vm1202, %v1514, %v1513
    %v1516 = vperm.slane %v1011, %v1204
    %v1517 = vsel %vm1206, %v1516, %v1515
    %v1518 = vperm.slane %v1014, %v1208
    %v1519 = vsel %vm1210, %v1518, %v1517
    %v1520 = vperm.slane %v1017, %v1212
    %v1521 = vsel %vm1214, %v1520, %v1519
    %v1522 = vperm.slane %v1020, %v1216
    %v1523 = vsel %vm1218, %v1522, %v1521
    %v1524 = vperm.slane %v1023, %v1220
    %v1525 = vsel %vm1222, %v1524, %v1523
    %v1526 = vperm.slane %v1026, %v1224
    %v1527 = vsel %vm1226, %v1526, %v1525
    %v1528 = vperm.slane %v1029, %v1228
    %v1529 = vsel %vm1230, %v1528, %v1527
    %v1530 = vperm.slane %v1032, %v1232
    %v1531 = vsel %vm1234, %v1530, %v1529
    %v1532 = vperm.slane %v1035, %v1236
    %v1533 = vsel %vm1238, %v1532, %v1531
    %v1534 = vperm.slane %v1038, %v1240
    %v1535 = vsel %vm1242, %v1534, %v1533
    %v1536 = vperm.slane %v1041, %v1244
    %v1537 = vsel %vm1246, %v1536, %v1535
    %v1538 = vperm.slane %v1044, %v1248
    %v1539 = vsel %vm1250, %v1538, %v1537
    %v1557 = vperm.slane %v1063, %v1190
    %v1558 = vperm.slane %v1066, %v1192
    %v1559 = vsel %vm1194, %v1558, %v1557
    %v1560 = vperm.slane %v1069, %v1196
    %v1561 = vsel %vm1198, %v1560, %v1559
    %v1562 = vperm.slane %v1072, %v1200
    %v1563 = vsel %vm1202, %v1562, %v1561
    %v1564 = vperm.slane %v1075, %v1204
    %v1565 = vsel %vm1206, %v1564, %v1563
    %v1566 = vperm.slane %v1078, %v1208
    %v1567 = vsel %vm1210, %v1566, %v1565
    %v1568 = vperm.slane %v1081, %v1212
    %v1569 = vsel %vm1214, %v1568, %v1567
    %v1570 = vperm.slane %v1084, %v1216
    %v1571 = vsel %vm1218, %v1570, %v1569
    %v1572 = vperm.slane %v1087, %v1220
    %v1573 = vsel %vm1222, %v1572, %v1571
    %v1574 = vperm.slane %v1090, %v1224
    %v1575 = vsel %vm1226, %v1574, %v1573
    %v1576 = vperm.slane %v1093, %v1228
    %v1577 = vsel %vm1230, %v1576, %v1575
    %v1578 = vperm.slane %v1096, %v1232
    %v1579 = vsel %vm1234, %v1578, %v1577
    %v1580 = vperm.slane %v1099, %v1236
    %v1581 = vsel %vm1238, %v1580, %v1579
    %v1582 = vperm.slane %v1102, %v1240
    %v1583 = vsel %vm1242, %v1582, %v1581
    %v1584 = vperm.slane %v1105, %v1244
    %v1585 = vsel %vm1246, %v1584, %v1583
    %v1586 = vperm.slane %v1108, %v1248
    %v1587 = vsel %vm1250, %v1586, %v1585
    %v1605 = vperm.slane %v1127, %v1190
    %v1606 = vperm.slane %v1130, %v1192
    %v1607 = vsel %vm1194, %v1606, %v1605
    %v1608 = vperm.slane %v1133, %v1196
    %v1609 = vsel %vm1198, %v1608, %v1607
    %v1610 = vperm.slane %v1136, %v1200
    %v1611 = vsel %vm1202, %v1610, %v1609
    %v1612 = vperm.slane %v1139, %v1204
    %v1613 = vsel %vm1206, %v1612, %v1611
    %v1614 = vperm.slane %v1142, %v1208
    %v1615 = vsel %vm1210, %v1614, %v1613
    %v1616 = vperm.slane %v1145, %v1212
    %v1617 = vsel %vm1214, %v1616, %v1615
    %v1618 = vperm.slane %v1148, %v1216
    %v1619 = vsel %vm1218, %v1618, %v1617
    %v1620 = vperm.slane %v1151, %v1220
    %v1621 = vsel %vm1222, %v1620, %v1619
    %v1622 = vperm.slane %v1154, %v1224
    %v1623 = vsel %vm1226, %v1622, %v1621
    %v1624 = vperm.slane %v1157, %v1228
    %v1625 = vsel %vm1230, %v1624, %v1623
    %v1626 = vperm.slane %v1160, %v1232
    %v1627 = vsel %vm1234, %v1626, %v1625
    %v1628 = vperm.slane %v1163, %v1236
    %v1629 = vsel %vm1238, %v1628, %v1627
    %v1630 = vperm.slane %v1166, %v1240
    %v1631 = vsel %vm1242, %v1630, %v1629
    %v1632 = vperm.slane %v1169, %v1244
    %v1633 = vsel %vm1246, %v1632, %v1631
    %v1634 = vperm.slane %v1172, %v1248
    %v1635 = vsel %vm1250, %v1634, %v1633
    %vm1637 = vcmask 1040384
    %v1638 = vsel %vm1637, %v1251, %v1299
    %vm1639 = vcmask 1041408
    %v1640 = vsel %vm1639, %v1638, %v1347
    %vm1641 = vcmask 1042432
    %v1642 = vsel %vm1641, %v1640, %v1395
    %vm1643 = vcmask 1043456
    %v1644 = vsel %vm1643, %v1642, %v1443
    %vm1645 = vcmask 1044480
    %v1646 = vsel %vm1645, %v1644, %v1491
    %vm1647 = vcmask 1045504
    %v1648 = vsel %vm1647, %v1646, %v1539
    %vm1649 = vcmask 1046528
    %v1650 = vsel %vm1649, %v1648, %v1587
    %1651 = vst [vmem:[#allocation2] sm:$0xff] %v1650
    %1652 = vst [vmem:[#allocation2 + $0x8] sm:$0x1] %v1635
    %v1669 = vperm.slane %v165, %v1190
    %v1670 = vperm.slane %v166, %v1192
    %v1671 = vsel %vm1194, %v1670, %v1669
    %v1672 = vperm.slane %v167, %v1196
    %v1673 = vsel %vm1198, %v1672, %v1671
    %v1674 = vperm.slane %v168, %v1200
    %v1675 = vsel %vm1202, %v1674, %v1673
    %v1676 = vperm.slane %v169, %v1204
    %v1677 = vsel %vm1206, %v1676, %v1675
    %v1678 = vperm.slane %v170, %v1208
    %v1679 = vsel %vm1210, %v1678, %v1677
    %v1680 = vperm.slane %v171, %v1212
    %v1681 = vsel %vm1214, %v1680, %v1679
    %v1682 = vperm.slane %v172, %v1216
    %v1683 = vsel %vm1218, %v1682, %v1681
    %v1684 = vperm.slane %v173, %v1220
    %v1685 = vsel %vm1222, %v1684, %v1683
    %v1686 = vperm.slane %v174, %v1224
    %v1687 = vsel %vm1226, %v1686, %v1685
    %v1688 = vperm.slane %v175, %v1228
    %v1689 = vsel %vm1230, %v1688, %v1687
    %v1690 = vperm.slane %v176, %v1232
    %v1691 = vsel %vm1234, %v1690, %v1689
    %v1692 = vperm.slane %v177, %v1236
    %v1693 = vsel %vm1238, %v1692, %v1691
    %v1694 = vperm.slane %v178, %v1240
    %v1695 = vsel %vm1242, %v1694, %v1693
    %v1696 = vperm.slane %v179, %v1244
    %v1697 = vsel %vm1246, %v1696, %v1695
    %v1698 = vperm.slane %v180, %v1248
    %v1699 = vsel %vm1250, %v1698, %v1697
    %v1717 = vperm.slane %v229, %v1190
    %v1718 = vperm.slane %v230, %v1192
    %v1719 = vsel %vm1194, %v1718, %v1717
    %v1720 = vperm.slane %v231, %v1196
    %v1721 = vsel %vm1198, %v1720, %v1719
    %v1722 = vperm.slane %v232, %v1200
    %v1723 = vsel %vm1202, %v1722, %v1721
    %v1724 = vperm.slane %v233, %v1204
    %v1725 = vsel %vm1206, %v1724, %v1723
    %v1726 = vperm.slane %v234, %v1208
    %v1727 = vsel %vm1210, %v1726, %v1725
    %v1728 = vperm.slane %v235, %v1212
    %v1729 = vsel %vm1214, %v1728, %v1727
    %v1730 = vperm.slane %v236, %v1216
    %v1731 = vsel %vm1218, %v1730, %v1729
    %v1732 = vperm.slane %v237, %v1220
    %v1733 = vsel %vm1222, %v1732, %v1731
    %v1734 = vperm.slane %v238, %v1224
    %v1735 = vsel %vm1226, %v1734, %v1733
    %v1736 = vperm.slane %v239, %v1228
    %v1737 = vsel %vm1230, %v1736, %v1735
    %v1738 = vperm.slane %v240, %v1232
    %v1739 = vsel %vm1234, %v1738, %v1737
    %v1740 = vperm.slane %v241, %v1236
    %v1741 = vsel %vm1238, %v1740, %v1739
    %v1742 = vperm.slane %v242, %v1240
    %v1743 = vsel %vm1242, %v1742, %v1741
    %v1744 = vperm.slane %v243, %v1244
    %v1745 = vsel %vm1246, %v1744, %v1743
    %v1746 = vperm.slane %v244, %v1248
    %v1747 = vsel %vm1250, %v1746, %v1745
    %v1765 = vperm.slane %v293, %v1190
    %v1766 = vperm.slane %v294, %v1192
    %v1767 = vsel %vm1194, %v1766, %v1765
    %v1768 = vperm.slane %v295, %v1196
    %v1769 = vsel %vm1198, %v1768, %v1767
    %v1770 = vperm.slane %v296, %v1200
    %v1771 = vsel %vm1202, %v1770, %v1769
    %v1772 = vperm.slane %v297, %v1204
    %v1773 = vsel %vm1206, %v1772, %v1771
    %v1774 = vperm.slane %v298, %v1208
    %v1775 = vsel %vm1210, %v1774, %v1773
    %v1776 = vperm.slane %v299, %v1212
    %v1777 = vsel %vm1214, %v1776, %v1775
    %v1778 = vperm.slane %v300, %v1216
    %v1779 = vsel %vm1218, %v1778, %v1777
    %v1780 = vperm.slane %v301, %v1220
    %v1781 = vsel %vm1222, %v1780, %v1779
    %v1782 = vperm.slane %v302, %v1224
    %v1783 = vsel %vm1226, %v1782, %v1781
    %v1784 = vperm.slane %v303, %v1228
    %v1785 = vsel %vm1230, %v1784, %v1783
    %v1786 = vperm.slane %v304, %v1232
    %v1787 = vsel %vm1234, %v1786, %v1785
    %v1788 = vperm.slane %v305, %v1236
    %v1789 = vsel %vm1238, %v1788, %v1787
    %v1790 = vperm.slane %v306, %v1240
    %v1791 = vsel %vm1242, %v1790, %v1789
    %v1792 = vperm.slane %v307, %v1244
    %v1793 = vsel %vm1246, %v1792, %v1791
    %v1794 = vperm.slane %v308, %v1248
    %v1795 = vsel %vm1250, %v1794, %v1793
    %v1797 = vsel %vm1637, %v1699, %v1747
    %v1798 = vsel %vm1639, %v1797, %v1795
    %1799 = vst [vmem:[#allocation4] sm:$0x7] %v1798
    %v1816 = vperm.slane %v357, %v1190
    %v1817 = vperm.slane %v358, %v1192
    %v1818 = vsel %vm1194, %v1817, %v1816
    %v1819 = vperm.slane %v359, %v1196
    %v1820 = vsel %vm1198, %v1819, %v1818
    %v1821 = vperm.slane %v360, %v1200
    %v1822 = vsel %vm1202, %v1821, %v1820
    %v1823 = vperm.slane %v361, %v1204
    %v1824 = vsel %vm1206, %v1823, %v1822
    %v1825 = vperm.slane %v362, %v1208
    %v1826 = vsel %vm1210, %v1825, %v1824
    %v1827 = vperm.slane %v363, %v1212
    %v1828 = vsel %vm1214, %v1827, %v1826
    %v1829 = vperm.slane %v364, %v1216
    %v1830 = vsel %vm1218, %v1829, %v1828
    %v1831 = vperm.slane %v365, %v1220
    %v1832 = vsel %vm1222, %v1831, %v1830
    %v1833 = vperm.slane %v366, %v1224
    %v1834 = vsel %vm1226, %v1833, %v1832
    %v1835 = vperm.slane %v367, %v1228
    %v1836 = vsel %vm1230, %v1835, %v1834
    %v1837 = vperm.slane %v368, %v1232
    %v1838 = vsel %vm1234, %v1837, %v1836
    %v1839 = vperm.slane %v369, %v1236
    %v1840 = vsel %vm1238, %v1839, %v1838
    %v1841 = vperm.slane %v370, %v1240
    %v1842 = vsel %vm1242, %v1841, %v1840
    %v1843 = vperm.slane %v371, %v1244
    %v1844 = vsel %vm1246, %v1843, %v1842
    %v1845 = vperm.slane %v372, %v1248
    %v1846 = vsel %vm1250, %v1845, %v1844
    %v1864 = vperm.slane %v421, %v1190
    %v1865 = vperm.slane %v422, %v1192
    %v1866 = vsel %vm1194, %v1865, %v1864
    %v1867 = vperm.slane %v423, %v1196
    %v1868 = vsel %vm1198, %v1867, %v1866
    %v1869 = vperm.slane %v424, %v1200
    %v1870 = vsel %vm1202, %v1869, %v1868
    %v1871 = vperm.slane %v425, %v1204
    %v1872 = vsel %vm1206, %v1871, %v1870
    %v1873 = vperm.slane %v426, %v1208
    %v1874 = vsel %vm1210, %v1873, %v1872
    %v1875 = vperm.slane %v427, %v1212
    %v1876 = vsel %vm1214, %v1875, %v1874
    %v1877 = vperm.slane %v428, %v1216
    %v1878 = vsel %vm1218, %v1877, %v1876
    %v1879 = vperm.slane %v429, %v1220
    %v1880 = vsel %vm1222, %v1879, %v1878
    %v1881 = vperm.slane %v430, %v1224
    %v1882 = vsel %vm1226, %v1881, %v1880
    %v1883 = vperm.slane %v431, %v1228
    %v1884 = vsel %vm1230, %v1883, %v1882
    %v1885 = vperm.slane %v432, %v1232
    %v1886 = vsel %vm1234, %v1885, %v1884
    %v1887 = vperm.slane %v433, %v1236
    %v1888 = vsel %vm1238, %v1887, %v1886
    %v1889 = vperm.slane %v434, %v1240
    %v1890 = vsel %vm1242, %v1889, %v1888
    %v1891 = vperm.slane %v435, %v1244
    %v1892 = vsel %vm1246, %v1891, %v1890
    %v1893 = vperm.slane %v436, %v1248
    %v1894 = vsel %vm1250, %v1893, %v1892
    %v1912 = vperm.slane %v485, %v1190
    %v1913 = vperm.slane %v486, %v1192
    %v1914 = vsel %vm1194, %v1913, %v1912
    %v1915 = vperm.slane %v487, %v1196
    %v1916 = vsel %vm1198, %v1915, %v1914
    %v1917 = vperm.slane %v488, %v1200
    %v1918 = vsel %vm1202, %v1917, %v1916
    %v1919 = vperm.slane %v489, %v1204
    %v1920 = vsel %vm1206, %v1919, %v1918
    %v1921 = vperm.slane %v490, %v1208
    %v1922 = vsel %vm1210, %v1921, %v1920
    %v1923 = vperm.slane %v491, %v1212
    %v1924 = vsel %vm1214, %v1923, %v1922
    %v1925 = vperm.slane %v492, %v1216
    %v1926 = vsel %vm1218, %v1925, %v1924
    %v1927 = vperm.slane %v493, %v1220
    %v1928 = vsel %vm1222, %v1927, %v1926
    %v1929 = vperm.slane %v494, %v1224
    %v1930 = vsel %vm1226, %v1929, %v1928
    %v1931 = vperm.slane %v495, %v1228
    %v1932 = vsel %vm1230, %v1931, %v1930
    %v1933 = vperm.slane %v496, %v1232
    %v1934 = vsel %vm1234, %v1933, %v1932
    %v1935 = vperm.slane %v497, %v1236
    %v1936 = vsel %vm1238, %v1935, %v1934
    %v1937 = vperm.slane %v498, %v1240
    %v1938 = vsel %vm1242, %v1937, %v1936
    %v1939 = vperm.slane %v499, %v1244
    %v1940 = vsel %vm1246, %v1939, %v1938
    %v1941 = vperm.slane %v500, %v1248
    %v1942 = vsel %vm1250, %v1941, %v1940
    %v1944 = vsel %vm1637, %v1846, %v1894
    %v1945 = vsel %vm1639, %v1944, %v1942
    %1946 = vst [vmem:[#allocation6] sm:$0x7] %v1945
    // Predicated region
    $region10: #{tpu_custom_call.1} parent=1 // pred_check
      _
    $region11: #{tpu_custom_call.1} parent=1 // pred_check_branch
      %1948 = sbr.rel (0) target = $region13
    $region12: #{tpu_custom_call.1} parent=1 // pred_region
      %1950 = vsyncadd [#allocation3], 0
      %s1951 = sshll.u32 [#allocation2], 4
      %s1952 = int_to_ptr.vmem [resolvable:$true] %s1951
      %s1953 = sshll.u32 %s2, 4
      %s1954 = int_to_ptr.hbm [resolvable:$true] %s1953
      %1959 = dma.vmem_to_hbm [thread:$0]  %s1952, 256, %s1954, [#allocation3], 128, 128, 8
    $region13: #{tpu_custom_call.1} parent=1 // pred_fallthru
      _
    // Predicated region
    $region14: #{tpu_custom_call.1} parent=1 // pred_check
      _
    $region15: #{tpu_custom_call.1} parent=1 // pred_check_branch
      %1961 = sbr.rel (0) target = $region17
    $region16: #{tpu_custom_call.1} parent=1 // pred_region
      %1963 = vsyncadd [#allocation5], 0
      %s1965 = sshll.u32 [#allocation4], 4
      %s1966 = int_to_ptr.vmem [resolvable:$true] %s1965
      %s1967 = sshll.u32 %s3, 4
      %s1968 = int_to_ptr.hbm [resolvable:$true] %s1967
      %1970 = dma.vmem_to_hbm [thread:$0]  %s1966, 64, %s1968, [#allocation5]
    $region17: #{tpu_custom_call.1} parent=1 // pred_fallthru
      _
    // Predicated region
    $region18: #{tpu_custom_call.1} parent=1 // pred_check
      _
    $region19: #{tpu_custom_call.1} parent=1 // pred_check_branch
      %1972 = sbr.rel (0) target = $region21
    $region20: #{tpu_custom_call.1} parent=1 // pred_region
      %1974 = vsyncadd [#allocation5], 0
      %s1976 = sshll.u32 [#allocation6], 4
      %s1977 = int_to_ptr.vmem [resolvable:$true] %s1976
      %s1978 = sshll.u32 %s4, 4
      %s1979 = int_to_ptr.hbm [resolvable:$true] %s1978
      %1981 = dma.vmem_to_hbm [thread:$0]  %s1977, 64, %s1979, [#allocation5]
    $region21: #{tpu_custom_call.1} parent=1 // pred_fallthru
      _
    // Predicated region
    $region22: #{tpu_custom_call.1} parent=1 // pred_check
      _
    $region23: #{tpu_custom_call.1} parent=1 // pred_check_branch
      %1983 = sbr.rel (0) target = $region25
    $region24: #{tpu_custom_call.1} parent=1 // pred_region
      %1985 = dma.done [#allocation3], 256
    $region25: #{tpu_custom_call.1} parent=1 // pred_fallthru
      _
    // Predicated region
    $region26: #{tpu_custom_call.1} parent=1 // pred_check
      _
    $region27: #{tpu_custom_call.1} parent=1 // pred_check_branch
      %1987 = sbr.rel (0) target = $region29
    $region28: #{tpu_custom_call.1} parent=1 // pred_region
      %1989 = dma.done [#allocation5], 64
    $region29: #{tpu_custom_call.1} parent=1 // pred_fallthru
      _
    // Predicated region
    $region30: #{tpu_custom_call.1} parent=1 // pred_check
      _
    $region31: #{tpu_custom_call.1} parent=1 // pred_check_branch
      %1991 = sbr.rel (0) target = $region33
    $region32: #{tpu_custom_call.1} parent=1 // pred_region
      %1993 = dma.done [#allocation5], 64
    $region33: #{tpu_custom_call.1} parent=1 // pred_fallthru
      _
    %1994 = vsyncpa [#allocation3], 1
    %1995 = vsyncpa [#allocation5], 1

</llo_original>
